<compile_context>
chip_gen: v7x
topology: tpu7x:2x2x1
jax: 0.10.0
libtpu: 0.0.40
codegen_flags: <defaults>
</compile_context>

<pallas_src>
import functools

import jax
import jax.numpy as jnp
from jax.experimental import pallas as pl
from jax.experimental.pallas import tpu as pltpu


def _round_up(x, m):
    return ((x + m - 1) // m) * m


_TILE_CAP = 512   # safe on v5e's 16 MiB scoped VMEM; good on v6e/v7x too.


# ----------------------------------------------------------------------------
# Pallas kernel: per-row null-feature blend (f32) + split-input 3-layer MLP
# (Linear -> SiLU -> Linear -> SiLU -> Linear), bf16 dots / f32 accumulation.
# ----------------------------------------------------------------------------
def _positionnet_kernel(pe_ref, xy_ref, mask_ref, null_pe_ref, null_xy_ref,
                        w1p_ref, w1x_ref, b1_ref, w2_ref, b2_ref,
                        w3_ref, b3_ref, out_ref):
    m = mask_ref[...]                                     # (TM, 1)      f32
    null_pe = null_pe_ref[...]                            # (1, in_dim)  f32
    null_xy = null_xy_ref[...]                            # (1, pos_dim) f32

    # blend = null + m * (x - null)  (== x*m + (1-m)*null, one multiply)
    pe = null_pe + m * (pe_ref[...].astype(jnp.float32) - null_pe)
    xy = null_xy + m * (xy_ref[...].astype(jnp.float32) - null_xy)

    # First linear, split across the two input slabs (no concat needed).
    h = (jnp.dot(pe.astype(jnp.bfloat16), w1p_ref[...],
                 preferred_element_type=jnp.float32)
         + jnp.dot(xy.astype(jnp.bfloat16), w1x_ref[...],
                   preferred_element_type=jnp.float32)
         + b1_ref[...])
    h = h * jax.nn.sigmoid(h)                             # SiLU (f32 VPU/EUP)

    h = jnp.dot(h.astype(jnp.bfloat16), w2_ref[...],
                preferred_element_type=jnp.float32) + b2_ref[...]
    h = h * jax.nn.sigmoid(h)                             # SiLU

    o = jnp.dot(h.astype(jnp.bfloat16), w3_ref[...],
                preferred_element_type=jnp.float32) + b3_ref[...]
    out_ref[...] = o.astype(out_ref.dtype)


def _mlp_pallas(pe, xy, mask, null_pe, null_xy, params, *, tm, out_dtype):
    """pe: (M, in_dim) bf16, xy: (M, pos_dim) bf16, mask: (M, 1) f32,
    null_pe: (1, in_dim) f32, null_xy: (1, pos_dim) f32 -> (M, out_dim)."""
    M, in_dim = pe.shape
    _, pos_dim = xy.shape
    w1p, w1x, b1, w2, b2, w3, b3 = params
    H1, H2, out_dim = w1p.shape[1], w2.shape[1], w3.shape[1]
    assert M % tm == 0, "rows must be padded to a multiple of the row tile"

    grid = (M // tm,)

    # Grid-invariant operands: single-buffer unconditionally (read once).
    inv = {"pipeline_mode": pl.Buffered(1)}
    # Row-tiled operands: double-buffer only when there is actually a pipeline.
    row = {} if grid[0] > 1 else {"pipeline_mode": pl.Buffered(1)}

    full = lambda r, c: pl.BlockSpec((r, c), lambda i: (0, 0), **inv)
    rows = lambda c: pl.BlockSpec((tm, c), lambda i: (i, 0), **row)

    out_itemsize = jnp.dtype(out_dtype).itemsize
    weight_bytes = ((w1p.size + w1x.size + w2.size + w3.size) * 2
                    + (b1.size + b2.size + b3.size) * 4
                    + (null_pe.size + null_xy.size) * 4)
    per_row_bytes = (in_dim + pos_dim) * 2 + 4 + out_dim * out_itemsize

    # v7x megacore: only shard rows across the 2 TCs when the per-core
    # streaming saved exceeds the duplicated grid-invariant weight DMA.
    megacore_threshold = max(1024, (2 * weight_bytes) // per_row_bytes)
    semantics = ("parallel",) if M >= megacore_threshold else ("arbitrary",)

    cost = pl.CostEstimate(
        flops=2 * M * (in_dim * H1 + pos_dim * H1 + H1 * H2 + H2 * out_dim),
        transcendentals=M * (H1 + H2),
        bytes_accessed=weight_bytes + M * per_row_bytes,
    )

    return pl.pallas_call(
        _positionnet_kernel,
        out_shape=jax.ShapeDtypeStruct((M, out_dim), out_dtype),
        grid_spec=pltpu.PrefetchScalarGridSpec(
            num_scalar_prefetch=0,
            grid=grid,
            in_specs=[
                rows(in_dim),            # positive embeddings row tile (bf16)
                rows(pos_dim),           # fourier xyxy row tile        (bf16)
                rows(1),                 # mask row tile                (f32)
                full(1, in_dim),         # null positive feature        (f32)
                full(1, pos_dim),        # null position feature        (f32)
                full(in_dim, H1),        # w1[:in_dim]                  (bf16)
                full(pos_dim, H1),       # w1[in_dim:]                  (bf16)
                full(1, H1),             # b1                           (f32)
                full(H1, H2),            # w2                           (bf16)
                full(1, H2),             # b2                           (f32)
                full(H2, out_dim),       # w3                           (bf16)
                full(1, out_dim),        # b3                           (f32)
            ],
            out_specs=pl.BlockSpec((tm, out_dim), lambda i: (i, 0)),
        ),
        compiler_params=pltpu.CompilerParams(dimension_semantics=semantics),
        cost_estimate=cost,
    )(pe, xy, mask, null_pe, null_xy, w1p, w1x, b1, w2, b2, w3, b3)


# ----------------------------------------------------------------------------
# Fourier embedder (tiny (B, N, 4) tensor; kept as XLA glue).  Matches GLIGEN
# FourierEmbedder: freq_bands = temperature**(arange(F)/F), output order
# cat([sin(f0 x), cos(f0 x), sin(f1 x), cos(f1 x), ...], -1).
# ----------------------------------------------------------------------------
def fourier_embed(boxes, num_freqs=8, temperature=100.0):
    B, N, C = boxes.shape
    freqs = temperature ** (jnp.arange(num_freqs, dtype=jnp.float32) / num_freqs)
    x = boxes[..., None, :] * freqs[None, None, :, None]        # (B, N, F, 4)
    emb = jnp.stack([jnp.sin(x), jnp.cos(x)], axis=-2)          # (B, N, F, 2, 4)
    return emb.reshape(B, N, num_freqs * 2 * C)                 # (B, N, F*2*4)


# ----------------------------------------------------------------------------
# Jitted forward: fourier embed + two bf16 slabs + pad + Pallas MLP + slice.
# ----------------------------------------------------------------------------
def _forward_impl(params, boxes, masks, positive_embeddings, *, num_freqs,
                  out_dtype):
    (w1p, w1x, b1, w2, b2, w3, b3, null_pos, null_xyxy) = params
    B, N, in_dim = positive_embeddings.shape

    xy = fourier_embed(boxes, num_freqs)                         # (B,N,pos_dim) f32
    pos_dim = xy.shape[-1]
    out_dim = w3.shape[1]
    M = B * N

    pe = positive_embeddings.astype(jnp.bfloat16).reshape(M, in_dim)
    xy = xy.astype(jnp.bfloat16).reshape(M, pos_dim)
    m = masks.reshape(M, 1).astype(jnp.float32)

    # Full-height row tile (rounded to 16 for bf16 sublane packing), capped.
    tm = min(_round_up(M, 16), _TILE_CAP)
    M_pad = _round_up(M, tm)
    if M_pad != M:
        # Padded rows carry mask=0 -> blended to null features, sliced off.
        pe = jnp.pad(pe, ((0, M_pad - M), (0, 0)))
        xy = jnp.pad(xy, ((0, M_pad - M), (0, 0)))
        m = jnp.pad(m, ((0, M_pad - M), (0, 0)))

    out = _mlp_pallas(pe, xy, m,
                      null_pos.astype(jnp.float32)[None, :],
                      null_xyxy.astype(jnp.float32)[None, :],
                      (w1p, w1x, b1, w2, b2, w3, b3),
                      tm=tm, out_dtype=out_dtype)
    return out[:M].reshape(B, N, out_dim)


# ----------------------------------------------------------------------------
# PositionNet module.
# ----------------------------------------------------------------------------
class PositionNetPallas:
    def __init__(self, in_dim, out_dim, fourier_freqs=8, hidden=512, key=None,
                 out_dtype=jnp.float32):
        self.in_dim = in_dim
        self.out_dim = out_dim
        self.fourier_freqs = fourier_freqs
        self.position_dim = fourier_freqs * 2 * 4

        if key is None:
            key = jax.random.PRNGKey(0)
        ks = jax.random.split(key, 6)
        # w1 is stored pre-split along its input axis (positive | fourier) so
        # the kernel never needs the concatenated activation slab.  Weights
        # bf16 (halves weight DMA, bf16 MXU); biases / null features f32.
        winit = lambda k, s: (0.02 * jax.random.normal(k, s)).astype(jnp.bfloat16)
        binit = lambda k, s: (0.02 * jax.random.normal(k, s)).astype(jnp.float32)
        self.w1_pe = winit(ks[0], (in_dim, hidden))
        self.w1_xy = winit(ks[1], (self.position_dim, hidden))
        self.b1 = binit(ks[2], (1, hidden))
        self.w2 = winit(ks[3], (hidden, hidden))
        self.b2 = binit(ks[4], (1, hidden))
        self.w3 = winit(ks[5], (hidden, out_dim))
        self.b3 = jnp.zeros((1, out_dim), jnp.float32)
        # null features (nn.Parameter(torch.zeros(...)) in the reference)
        self.null_positive_feature = jnp.zeros((in_dim,), jnp.float32)
        self.null_position_feature = jnp.zeros((self.position_dim,), jnp.float32)

        self._forward = jax.jit(functools.partial(
            _forward_impl, num_freqs=fourier_freqs, out_dtype=out_dtype))

    def params(self):
        return (self.w1_pe, self.w1_xy, self.b1, self.w2, self.b2,
                self.w3, self.b3,
                self.null_positive_feature, self.null_position_feature)

    def __call__(self, boxes, masks, positive_embeddings):
        B, N, _ = boxes.shape
        assert positive_embeddings.shape == (B, N, self.in_dim)
        out = self._forward(self.params(), boxes, masks, positive_embeddings)
        assert out.shape == (B, N, self.out_dim)
        return out


# ----------------------------------------------------------------------------
# Pure-JAX references.
# ----------------------------------------------------------------------------
def reference_forward_bf16(net, boxes, masks, positive_embeddings):
    """Mirrors the kernel's bf16 dot boundaries (apples-to-apples)."""
    m = masks[..., None].astype(jnp.float32)
    xy = fourier_embed(boxes, net.fourier_freqs)
    pe = positive_embeddings.astype(jnp.bfloat16).astype(jnp.float32)
    xy = xy.astype(jnp.bfloat16).astype(jnp.float32)
    npe = net.null_positive_feature[None, None, :]
    nxy = net.null_position_feature[None, None, :]
    pe = npe + m * (pe - npe)
    xy = nxy + m * (xy - nxy)
    h = (jnp.dot(pe.astype(jnp.bfloat16), net.w1_pe,
                 preferred_element_type=jnp.float32)
         + jnp.dot(xy.astype(jnp.bfloat16), net.w1_xy,
                   preferred_element_type=jnp.float32) + net.b1)
    h = h * jax.nn.sigmoid(h)
    h = jnp.dot(h.astype(jnp.bfloat16), net.w2,
                preferred_element_type=jnp.float32) + net.b2
    h = h * jax.nn.sigmoid(h)
    return jnp.dot(h.astype(jnp.bfloat16), net.w3,
                   preferred_element_type=jnp.float32) + net.b3


def reference_forward_f32(net, boxes, masks, positive_embeddings):
    """Original-module semantics entirely in f32 (loose sanity check)."""
    m = masks[..., None].astype(jnp.float32)
    xy = fourier_embed(boxes, net.fourier_freqs)
    pe = positive_embeddings * m + (1 - m) * net.null_positive_feature[None, None, :]
    xy = xy * m + (1 - m) * net.null_position_feature[None, None, :]
    w1 = jnp.concatenate([net.w1_pe, net.w1_xy], axis=0).astype(jnp.float32)
    h = jnp.concatenate([pe, xy], axis=-1) @ w1 + net.b1
    h = h * jax.nn.sigmoid(h)
    h = h @ net.w2.astype(jnp.float32) + net.b2
    h = h * jax.nn.sigmoid(h)
    return h @ net.w3.astype(jnp.float32) + net.b3


if __name__ == "__main__":
    # Small shapes consistent with the module (real module: in=out=768).
    B, N = 2, 8             # batch, max_objs -> M = 16 rows, grid=(1,)
    in_dim, out_dim = 128, 128
    fourier_freqs = 8       # position_dim = 8 * 2 * 4 = 64

    key = jax.random.PRNGKey(0)
    k_box, k_mask, k_emb, k_param, k_n1, k_n2 = jax.random.split(key, 6)

    boxes = jax.random.uniform(k_box, (B, N, 4), dtype=jnp.float32)
    masks = (jax.random.uniform(k_mask, (B, N)) > 0.5).astype(jnp.float32)
    positive_embeddings = jax.random.normal(k_emb, (B, N, in_dim), dtype=jnp.float32)

    net = PositionNetPallas(in_dim, out_dim, fourier_freqs, key=k_param)
    # Give the (normally zero-init) null features nonzero values so the
    # mask-blend path is actually exercised by the check.
    net.null_positive_feature = 0.1 * jax.random.normal(k_n1, (in_dim,))
    net.null_position_feature = 0.1 * jax.random.normal(k_n2, (net.position_dim,))

    out = net(boxes, masks, positive_embeddings)
    out = jax.block_until_ready(out)
    assert out.shape == (B, N, out_dim)
    assert out.dtype == jnp.float32

    ref_bf16 = reference_forward_bf16(net, boxes, masks, positive_embeddings)
    assert jnp.allclose(out, ref_bf16, atol=1e-2, rtol=1e-2), \
        "mismatch vs bf16-boundary reference"

    ref_f32 = reference_forward_f32(net, boxes, masks, positive_embeddings)
    assert jnp.allclose(out, ref_f32, atol=5e-2, rtol=1e-1), \
        "mismatch vs f32 reference (bf16 quantization drift too large)"

    print("KERNEL_OK")
</pallas_src>

<mosaic_0001>
module attributes {stable_mosaic.version = 11 : i64} {
  func.func @_positionnet_kernel(%arg0: i32, %arg1: memref<16x128xbf16, #tpu.memory_space<vmem>>, %arg2: memref<16x64xbf16, #tpu.memory_space<vmem>>, %arg3: memref<16x1xf32, #tpu.memory_space<vmem>>, %arg4: memref<1x128xf32, #tpu.memory_space<vmem>>, %arg5: memref<1x64xf32, #tpu.memory_space<vmem>>, %arg6: memref<128x512xbf16, #tpu.memory_space<vmem>>, %arg7: memref<64x512xbf16, #tpu.memory_space<vmem>>, %arg8: memref<1x512xf32, #tpu.memory_space<vmem>>, %arg9: memref<512x512xbf16, #tpu.memory_space<vmem>>, %arg10: memref<1x512xf32, #tpu.memory_space<vmem>>, %arg11: memref<512x128xbf16, #tpu.memory_space<vmem>>, %arg12: memref<1x128xf32, #tpu.memory_space<vmem>>, %arg13: memref<16x128xf32, #tpu.memory_space<vmem>>) attributes {dimension_semantics = [#tpu.dimension_semantics<arbitrary>], iteration_bounds = array<i64: 1>, scalar_prefetch = 0 : i64, scratch_operands = 0 : i64, tpu.core_type = #tpu.core_type<tc>, window_params = [{pipeline_mode = #tpu.pipeline_mode<synchronous>, transform_indices = @transform_0, window_bounds = array<i64: 16, 128>}, {pipeline_mode = #tpu.pipeline_mode<synchronous>, transform_indices = @transform_1, window_bounds = array<i64: 16, 64>}, {pipeline_mode = #tpu.pipeline_mode<synchronous>, transform_indices = @transform_2, window_bounds = array<i64: 16, 1>}, {pipeline_mode = #tpu.pipeline_mode<synchronous>, transform_indices = @transform_3, window_bounds = array<i64: 1, 128>}, {pipeline_mode = #tpu.pipeline_mode<synchronous>, transform_indices = @transform_4, window_bounds = array<i64: 1, 64>}, {pipeline_mode = #tpu.pipeline_mode<synchronous>, transform_indices = @transform_5, window_bounds = array<i64: 128, 512>}, {pipeline_mode = #tpu.pipeline_mode<synchronous>, transform_indices = @transform_6, window_bounds = array<i64: 64, 512>}, {pipeline_mode = #tpu.pipeline_mode<synchronous>, transform_indices = @transform_7, window_bounds = array<i64: 1, 512>}, {pipeline_mode = #tpu.pipeline_mode<synchronous>, transform_indices = @transform_8, window_bounds = array<i64: 512, 512>}, {pipeline_mode = #tpu.pipeline_mode<synchronous>, transform_indices = @transform_9, window_bounds = array<i64: 1, 512>}, {pipeline_mode = #tpu.pipeline_mode<synchronous>, transform_indices = @transform_10, window_bounds = array<i64: 512, 128>}, {pipeline_mode = #tpu.pipeline_mode<synchronous>, transform_indices = @transform_11, window_bounds = array<i64: 1, 128>}, {transform_indices = @transform_12, window_bounds = array<i64: 16, 128>}]} {
    %c0 = arith.constant 0 : index
    %c0_0 = arith.constant 0 : index
    %0 = vector.load %arg3[%c0, %c0_0] : memref<16x1xf32, #tpu.memory_space<vmem>>, vector<16x1xf32>
    %c0_1 = arith.constant 0 : index
    %c0_2 = arith.constant 0 : index
    %1 = vector.load %arg4[%c0_1, %c0_2] : memref<1x128xf32, #tpu.memory_space<vmem>>, vector<1x128xf32>
    %c0_3 = arith.constant 0 : index
    %c0_4 = arith.constant 0 : index
    %2 = vector.load %arg5[%c0_3, %c0_4] : memref<1x64xf32, #tpu.memory_space<vmem>>, vector<1x64xf32>
    %c0_5 = arith.constant 0 : index
    %c0_6 = arith.constant 0 : index
    %3 = vector.load %arg1[%c0_5, %c0_6] : memref<16x128xbf16, #tpu.memory_space<vmem>>, vector<16x128xbf16>
    %4 = arith.extf %3 : vector<16x128xbf16> to vector<16x128xf32>
    %5 = vector.broadcast %1 : vector<1x128xf32> to vector<16x128xf32>
    %6 = arith.subf %4, %5 : vector<16x128xf32>
    %7 = vector.broadcast %0 : vector<16x1xf32> to vector<16x128xf32>
    %8 = arith.mulf %7, %6 : vector<16x128xf32>
    %9 = vector.broadcast %1 : vector<1x128xf32> to vector<16x128xf32>
    %10 = arith.addf %9, %8 : vector<16x128xf32>
    %c0_7 = arith.constant 0 : index
    %c0_8 = arith.constant 0 : index
    %11 = vector.load %arg2[%c0_7, %c0_8] : memref<16x64xbf16, #tpu.memory_space<vmem>>, vector<16x64xbf16>
    %12 = arith.extf %11 : vector<16x64xbf16> to vector<16x64xf32>
    %13 = vector.broadcast %2 : vector<1x64xf32> to vector<16x64xf32>
    %14 = arith.subf %12, %13 : vector<16x64xf32>
    %15 = vector.broadcast %0 : vector<16x1xf32> to vector<16x64xf32>
    %16 = arith.mulf %15, %14 : vector<16x64xf32>
    %17 = vector.broadcast %2 : vector<1x64xf32> to vector<16x64xf32>
    %18 = arith.addf %17, %16 : vector<16x64xf32>
    %19 = arith.truncf %10 : vector<16x128xf32> to vector<16x128xbf16>
    %c0_9 = arith.constant 0 : index
    %c0_10 = arith.constant 0 : index
    %20 = vector.load %arg6[%c0_9, %c0_10] : memref<128x512xbf16, #tpu.memory_space<vmem>>, vector<128x512xbf16>
    %cst = arith.constant dense<0.000000e+00> : vector<16x512xf32>
    %21 = tpu.matmul %19, %20, %cst {dimension_numbers = #tpu.dot_dimension_numbers<[1], [0], [0], [1], [0, 0, 1, 1], [], []>} : vector<16x128xbf16>, vector<128x512xbf16>, vector<16x512xf32> -> vector<16x512xf32>
    %22 = arith.truncf %18 : vector<16x64xf32> to vector<16x64xbf16>
    %c0_11 = arith.constant 0 : index
    %c0_12 = arith.constant 0 : index
    %23 = vector.load %arg7[%c0_11, %c0_12] : memref<64x512xbf16, #tpu.memory_space<vmem>>, vector<64x512xbf16>
    %cst_13 = arith.constant dense<0.000000e+00> : vector<16x512xf32>
    %24 = tpu.matmul %22, %23, %cst_13 {dimension_numbers = #tpu.dot_dimension_numbers<[1], [0], [0], [1], [0, 0, 1, 1], [], []>} : vector<16x64xbf16>, vector<64x512xbf16>, vector<16x512xf32> -> vector<16x512xf32>
    %25 = arith.addf %21, %24 : vector<16x512xf32>
    %c0_14 = arith.constant 0 : index
    %c0_15 = arith.constant 0 : index
    %26 = vector.load %arg8[%c0_14, %c0_15] : memref<1x512xf32, #tpu.memory_space<vmem>>, vector<1x512xf32>
    %27 = vector.broadcast %26 : vector<1x512xf32> to vector<16x512xf32>
    %28 = arith.addf %25, %27 : vector<16x512xf32>
    %29 = arith.negf %28 : vector<16x512xf32>
    %30 = math.exp %29 : vector<16x512xf32>
    %cst_16 = arith.constant 1.000000e+00 : f32
    %31 = vector.broadcast %cst_16 : f32 to vector<16x512xf32>
    %32 = arith.addf %31, %30 : vector<16x512xf32>
    %33 = arith.divf %31, %32 : vector<16x512xf32>
    %34 = arith.mulf %28, %33 : vector<16x512xf32>
    %35 = arith.truncf %34 : vector<16x512xf32> to vector<16x512xbf16>
    %c0_17 = arith.constant 0 : index
    %c0_18 = arith.constant 0 : index
    %36 = vector.load %arg9[%c0_17, %c0_18] : memref<512x512xbf16, #tpu.memory_space<vmem>>, vector<512x512xbf16>
    %cst_19 = arith.constant dense<0.000000e+00> : vector<16x512xf32>
    %37 = tpu.matmul %35, %36, %cst_19 {dimension_numbers = #tpu.dot_dimension_numbers<[1], [0], [0], [1], [0, 0, 1, 1], [], []>} : vector<16x512xbf16>, vector<512x512xbf16>, vector<16x512xf32> -> vector<16x512xf32>
    %c0_20 = arith.constant 0 : index
    %c0_21 = arith.constant 0 : index
    %38 = vector.load %arg10[%c0_20, %c0_21] : memref<1x512xf32, #tpu.memory_space<vmem>>, vector<1x512xf32>
    %39 = vector.broadcast %38 : vector<1x512xf32> to vector<16x512xf32>
    %40 = arith.addf %37, %39 : vector<16x512xf32>
    %41 = arith.negf %40 : vector<16x512xf32>
    %42 = math.exp %41 : vector<16x512xf32>
    %cst_22 = arith.constant 1.000000e+00 : f32
    %43 = vector.broadcast %cst_22 : f32 to vector<16x512xf32>
    %44 = arith.addf %43, %42 : vector<16x512xf32>
    %45 = arith.divf %43, %44 : vector<16x512xf32>
    %46 = arith.mulf %40, %45 : vector<16x512xf32>
    %47 = arith.truncf %46 : vector<16x512xf32> to vector<16x512xbf16>
    %c0_23 = arith.constant 0 : index
    %c0_24 = arith.constant 0 : index
    %48 = vector.load %arg11[%c0_23, %c0_24] : memref<512x128xbf16, #tpu.memory_space<vmem>>, vector<512x128xbf16>
    %cst_25 = arith.constant dense<0.000000e+00> : vector<16x128xf32>
    %49 = tpu.matmul %47, %48, %cst_25 {dimension_numbers = #tpu.dot_dimension_numbers<[1], [0], [0], [1], [0, 0, 1, 1], [], []>} : vector<16x512xbf16>, vector<512x128xbf16>, vector<16x128xf32> -> vector<16x128xf32>
    %c0_26 = arith.constant 0 : index
    %c0_27 = arith.constant 0 : index
    %50 = vector.load %arg12[%c0_26, %c0_27] : memref<1x128xf32, #tpu.memory_space<vmem>>, vector<1x128xf32>
    %51 = vector.broadcast %50 : vector<1x128xf32> to vector<16x128xf32>
    %52 = arith.addf %49, %51 : vector<16x128xf32>
    %c0_28 = arith.constant 0 : index
    %c0_29 = arith.constant 0 : index
    %53 = vector.load %arg13[%c0_28, %c0_29] : memref<16x128xf32, #tpu.memory_space<vmem>>, vector<16x128xf32>
    tpu.vector_store %arg13[%c0_28, %c0_29], %52 {strides = array<i32>} : memref<16x128xf32, #tpu.memory_space<vmem>>, vector<16x128xf32>,
    return
  }
  func.func @transform_0(%arg0: i32) -> (i32, i32) {
    %c0_i32 = arith.constant 0 : i32
    %c0_i32_0 = arith.constant 0 : i32
    return %arg0, %c0_i32 : i32, i32
  }
  func.func @transform_1(%arg0: i32) -> (i32, i32) {
    %c0_i32 = arith.constant 0 : i32
    %c0_i32_0 = arith.constant 0 : i32
    return %arg0, %c0_i32 : i32, i32
  }
  func.func @transform_2(%arg0: i32) -> (i32, i32) {
    %c0_i32 = arith.constant 0 : i32
    %c0_i32_0 = arith.constant 0 : i32
    return %arg0, %c0_i32 : i32, i32
  }
  func.func @transform_3(%arg0: i32) -> (i32, i32) {
    %c0_i32 = arith.constant 0 : i32
    %c0_i32_0 = arith.constant 0 : i32
    %c0_i32_1 = arith.constant 0 : i32
    return %c0_i32, %c0_i32_0 : i32, i32
  }
  func.func @transform_4(%arg0: i32) -> (i32, i32) {
    %c0_i32 = arith.constant 0 : i32
    %c0_i32_0 = arith.constant 0 : i32
    %c0_i32_1 = arith.constant 0 : i32
    return %c0_i32, %c0_i32_0 : i32, i32
  }
  func.func @transform_5(%arg0: i32) -> (i32, i32) {
    %c0_i32 = arith.constant 0 : i32
    %c0_i32_0 = arith.constant 0 : i32
    %c0_i32_1 = arith.constant 0 : i32
    return %c0_i32, %c0_i32_0 : i32, i32
  }
  func.func @transform_6(%arg0: i32) -> (i32, i32) {
    %c0_i32 = arith.constant 0 : i32
    %c0_i32_0 = arith.constant 0 : i32
    %c0_i32_1 = arith.constant 0 : i32
    return %c0_i32, %c0_i32_0 : i32, i32
  }
  func.func @transform_7(%arg0: i32) -> (i32, i32) {
    %c0_i32 = arith.constant 0 : i32
    %c0_i32_0 = arith.constant 0 : i32
    %c0_i32_1 = arith.constant 0 : i32
    return %c0_i32, %c0_i32_0 : i32, i32
  }
  func.func @transform_8(%arg0: i32) -> (i32, i32) {
    %c0_i32 = arith.constant 0 : i32
    %c0_i32_0 = arith.constant 0 : i32
    %c0_i32_1 = arith.constant 0 : i32
    return %c0_i32, %c0_i32_0 : i32, i32
  }
  func.func @transform_9(%arg0: i32) -> (i32, i32) {
    %c0_i32 = arith.constant 0 : i32
    %c0_i32_0 = arith.constant 0 : i32
    %c0_i32_1 = arith.constant 0 : i32
    return %c0_i32, %c0_i32_0 : i32, i32
  }
  func.func @transform_10(%arg0: i32) -> (i32, i32) {
    %c0_i32 = arith.constant 0 : i32
    %c0_i32_0 = arith.constant 0 : i32
    %c0_i32_1 = arith.constant 0 : i32
    return %c0_i32, %c0_i32_0 : i32, i32
  }
  func.func @transform_11(%arg0: i32) -> (i32, i32) {
    %c0_i32 = arith.constant 0 : i32
    %c0_i32_0 = arith.constant 0 : i32
    %c0_i32_1 = arith.constant 0 : i32
    return %c0_i32, %c0_i32_0 : i32, i32
  }
  func.func @transform_12(%arg0: i32) -> (i32, i32) {
    %c0_i32 = arith.constant 0 : i32
    %c0_i32_0 = arith.constant 0 : i32
    return %arg0, %c0_i32 : i32, i32
  }
}

</mosaic_0001>

<llo_original>
// kernel: _forward_impl.1
$region0: #{_forward_impl.1}
  #allocation0 [shape = 'u32[]', space=smem, size = 0x4, offset = 0x4, fixed_abs, tag = 'smem constant byte address 0x4 - core index']
  #allocation1 [shape = 'u32[144,128]{1,0:T(1,128)}', space=vmem, size = 0x12000, scoped, tag = 'internal scratch']
  %s0 = inlined_call_operand.vmem [shape: bf16[16,128], index: 0, kind: input, shape index: {}]
  %s1 = inlined_call_operand.vmem [shape: bf16[16,64], index: 1, kind: input, shape index: {}]
  %s2 = inlined_call_operand.vmem [shape: f32[16,1], index: 2, kind: input, shape index: {}]
  %s3 = inlined_call_operand.vmem [shape: f32[1,128], index: 3, kind: input, shape index: {}]
  %s4 = inlined_call_operand.vmem [shape: f32[1,64], index: 4, kind: input, shape index: {}]
  %s5 = inlined_call_operand.vmem [shape: bf16[128,512], index: 5, kind: input, shape index: {}]
  %s6 = inlined_call_operand.hbm [shape: bf16[64,512], index: 6, kind: input, shape index: {}]
  %s7 = inlined_call_operand.hbm [shape: f32[1,512], index: 7, kind: input, shape index: {}]
  %s8 = inlined_call_operand.hbm [shape: bf16[512,512], index: 8, kind: input, shape index: {}]
  %s9 = inlined_call_operand.hbm [shape: f32[1,512], index: 9, kind: input, shape index: {}]
  %s10 = inlined_call_operand.vmem [shape: bf16[512,128], index: 10, kind: input, shape index: {}]
  %s11 = inlined_call_operand.hbm [shape: f32[1,128], index: 11, kind: input, shape index: {}]
  %s12 = inlined_call_operand.hbm [shape: f32[16,128], index: 12, kind: output, shape index: {}]
  %s13 = sld [smem:[#allocation0]]
  $region78: #{_forward_impl.1} parent=0
    _
  %s15 = ssub.s32 1, %s13
  %s16 = scalar_select 0, %s15, %s13
  $region1: #{_forward_impl.1} parent=0
    #allocation2 [shape = 'u8[65536]{0}', space=vmem, size = 0x10000, scoped, tag = 'input window, operand 6, single buffered']
    #allocation3 [shape = 's32[1]{0}', space=sflag, size = 0x4, scoped, tag = 'scoped memory for _forward_impl.1']
    #allocation4 [shape = 's32[1]{0}', space=sflag, size = 0x4, scoped, tag = 'scoped memory for _forward_impl.1']
    #allocation5 [shape = 'u8[2048]{0}', space=vmem, size = 0x800, scoped, tag = 'input window, operand 7, single buffered']
    #allocation6 [shape = 's32[1]{0}', space=sflag, size = 0x4, scoped, tag = 'scoped memory for _forward_impl.1']
    #allocation7 [shape = 'u8[524288]{0}', space=vmem, size = 0x80000, scoped, tag = 'input window, operand 8, single buffered']
    #allocation8 [shape = 'u8[2048]{0}', space=vmem, size = 0x800, scoped, tag = 'input window, operand 9, single buffered']
    #allocation9 [shape = 's32[1]{0}', space=sflag, size = 0x4, scoped, tag = 'scoped memory for _forward_impl.1']
    #allocation10 [shape = 'u8[512]{0}', space=vmem, size = 0x400, scoped, tag = 'input window, operand 11, single buffered']
    #allocation11 [shape = 'u8[8192]{0}', space=vmem, size = 0x2000, scoped, tag = 'output window, operand 0, single buffered']
    %17 = vsyncpa [#allocation3], 0
    %18 = vsyncpa [#allocation6], 0
    %19 = vsyncpa [#allocation9], 0
    %20 = vsyncpa [#allocation4], 0
    // Predicated region
    $region2: #{_forward_impl.1} parent=1 // pred_check
      _
    $region3: #{_forward_impl.1} parent=1 // pred_check_branch
      %22 = sbr.rel (0) target = $region5
    $region4: #{_forward_impl.1} parent=1 // pred_region
      _
    $region5: #{_forward_impl.1} parent=1 // pred_fallthru
      _
    // Predicated region
    $region6: #{_forward_impl.1} parent=1 // pred_check
      _
    $region7: #{_forward_impl.1} parent=1 // pred_check_branch
      %24 = sbr.rel (0) target = $region9
    $region8: #{_forward_impl.1} parent=1 // pred_region
      _
    $region9: #{_forward_impl.1} parent=1 // pred_fallthru
      _
    // Predicated region
    $region10: #{_forward_impl.1} parent=1 // pred_check
      _
    $region11: #{_forward_impl.1} parent=1 // pred_check_branch
      %26 = sbr.rel (0) target = $region13
    $region12: #{_forward_impl.1} parent=1 // pred_region
      _
    $region13: #{_forward_impl.1} parent=1 // pred_fallthru
      _
    // Predicated region
    $region14: #{_forward_impl.1} parent=1 // pred_check
      _
    $region15: #{_forward_impl.1} parent=1 // pred_check_branch
      %28 = sbr.rel (0) target = $region17
    $region16: #{_forward_impl.1} parent=1 // pred_region
      _
    $region17: #{_forward_impl.1} parent=1 // pred_fallthru
      _
    // Predicated region
    $region18: #{_forward_impl.1} parent=1 // pred_check
      _
    $region19: #{_forward_impl.1} parent=1 // pred_check_branch
      %30 = sbr.rel (0) target = $region21
    $region20: #{_forward_impl.1} parent=1 // pred_region
      _
    $region21: #{_forward_impl.1} parent=1 // pred_fallthru
      _
    // Predicated region
    $region22: #{_forward_impl.1} parent=1 // pred_check
      _
    $region23: #{_forward_impl.1} parent=1 // pred_check_branch
      %32 = sbr.rel (0) target = $region25
    $region24: #{_forward_impl.1} parent=1 // pred_region
      _
    $region25: #{_forward_impl.1} parent=1 // pred_fallthru
      _
    // Predicated region
    $region26: #{_forward_impl.1} parent=1 // pred_check
      _
    $region27: #{_forward_impl.1} parent=1 // pred_check_branch
      %34 = sbr.rel (0) target = $region29
    $region28: #{_forward_impl.1} parent=1 // pred_region
      %s36 = ssub.s32 2048, 2048
      %37 = vsyncadd [#allocation3], %s36
      %s38 = sshll.u32 [#allocation2], 4
      %s39 = int_to_ptr.vmem [resolvable:$true] %s38
      %44 = dma.hbm_to_vmem [thread:$0]  %s6, 2048, %s39, [#allocation3], 256, 256, 16
    $region29: #{_forward_impl.1} parent=1 // pred_fallthru
      _
    // Predicated region
    $region30: #{_forward_impl.1} parent=1 // pred_check
      _
    $region31: #{_forward_impl.1} parent=1 // pred_check_branch
      %46 = sbr.rel (0) target = $region33
    $region32: #{_forward_impl.1} parent=1 // pred_region
      %s48 = ssub.s32 64, 64
      %49 = vsyncadd [#allocation6], %s48
      %s51 = sshll.u32 [#allocation5], 4
      %s52 = int_to_ptr.vmem [resolvable:$true] %s51
      %54 = dma.hbm_to_vmem [thread:$0]  %s7, 64, %s52, [#allocation6]
    $region33: #{_forward_impl.1} parent=1 // pred_fallthru
      _
    // Predicated region
    $region34: #{_forward_impl.1} parent=1 // pred_check
      _
    $region35: #{_forward_impl.1} parent=1 // pred_check_branch
      %56 = sbr.rel (0) target = $region37
    $region36: #{_forward_impl.1} parent=1 // pred_region
      %s58 = ssub.s32 16384, 16384
      %59 = vsyncadd [#allocation6], %s58
      %s60 = sshll.u32 [#allocation7], 4
      %s61 = int_to_ptr.vmem [resolvable:$true] %s60
      %66 = dma.hbm_to_vmem [thread:$0]  %s8, 16384, %s61, [#allocation6], 256, 256, 16
    $region37: #{_forward_impl.1} parent=1 // pred_fallthru
      _
    // Predicated region
    $region38: #{_forward_impl.1} parent=1 // pred_check
      _
    $region39: #{_forward_impl.1} parent=1 // pred_check_branch
      %68 = sbr.rel (0) target = $region41
    $region40: #{_forward_impl.1} parent=1 // pred_region
      %s70 = ssub.s32 64, 64
      %71 = vsyncadd [#allocation9], %s70
      %s73 = sshll.u32 [#allocation8], 4
      %s74 = int_to_ptr.vmem [resolvable:$true] %s73
      %76 = dma.hbm_to_vmem [thread:$0]  %s9, 64, %s74, [#allocation9]
    $region41: #{_forward_impl.1} parent=1 // pred_fallthru
      _
    // Predicated region
    $region42: #{_forward_impl.1} parent=1 // pred_check
      _
    $region43: #{_forward_impl.1} parent=1 // pred_check_branch
      %78 = sbr.rel (0) target = $region45
    $region44: #{_forward_impl.1} parent=1 // pred_region
      _
    $region45: #{_forward_impl.1} parent=1 // pred_fallthru
      _
    // Predicated region
    $region46: #{_forward_impl.1} parent=1 // pred_check
      _
    $region47: #{_forward_impl.1} parent=1 // pred_check_branch
      %80 = sbr.rel (0) target = $region49
    $region48: #{_forward_impl.1} parent=1 // pred_region
      %s82 = ssub.s32 16, 16
      %83 = vsyncadd [#allocation9], %s82
      %s85 = sshll.u32 [#allocation10], 4
      %s86 = int_to_ptr.vmem [resolvable:$true] %s85
      %88 = dma.hbm_to_vmem [thread:$0]  %s11, 16, %s86, [#allocation9]
    $region49: #{_forward_impl.1} parent=1 // pred_fallthru
      _
    // Predicated region
    $region50: #{_forward_impl.1} parent=1 // pred_check
      _
    $region51: #{_forward_impl.1} parent=1 // pred_check_branch
      %90 = sbr.rel (0) target = $region53
    $region52: #{_forward_impl.1} parent=1 // pred_region
      %91 = dma.done [#allocation3], 2048
    $region53: #{_forward_impl.1} parent=1 // pred_fallthru
      _
    // Predicated region
    $region54: #{_forward_impl.1} parent=1 // pred_check
      _
    $region55: #{_forward_impl.1} parent=1 // pred_check_branch
      %93 = sbr.rel (0) target = $region57
    $region56: #{_forward_impl.1} parent=1 // pred_region
      %94 = dma.done [#allocation6], 64
    $region57: #{_forward_impl.1} parent=1 // pred_fallthru
      _
    // Predicated region
    $region58: #{_forward_impl.1} parent=1 // pred_check
      _
    $region59: #{_forward_impl.1} parent=1 // pred_check_branch
      %96 = sbr.rel (0) target = $region61
    $region60: #{_forward_impl.1} parent=1 // pred_region
      %97 = dma.done [#allocation6], 16384
    $region61: #{_forward_impl.1} parent=1 // pred_fallthru
      _
    // Predicated region
    $region62: #{_forward_impl.1} parent=1 // pred_check
      _
    $region63: #{_forward_impl.1} parent=1 // pred_check_branch
      %99 = sbr.rel (0) target = $region65
    $region64: #{_forward_impl.1} parent=1 // pred_region
      %100 = dma.done [#allocation9], 64
    $region65: #{_forward_impl.1} parent=1 // pred_fallthru
      _
    // Predicated region
    $region66: #{_forward_impl.1} parent=1 // pred_check
      _
    $region67: #{_forward_impl.1} parent=1 // pred_check_branch
      %102 = sbr.rel (0) target = $region69
    $region68: #{_forward_impl.1} parent=1 // pred_region
      %103 = dma.done [#allocation9], 16
    $region69: #{_forward_impl.1} parent=1 // pred_fallthru
      _
    %v105 = vld [vmem:[%s2] sm:$0xff]
    %v106 = vld [vmem:[%s2 + $0x8] sm:$0xff]
    %v107 = vld [vmem:[%s3] sm:$0x1]
    %v108 = vld [vmem:[%s4] sm:$0x1]
    %v109 = vld [vmem:[%s0] sm:$0xf]
    %v110 = vld [vmem:[%s0 + $0x4] sm:$0xf]
    %v111 = vunpack.c.l.bf16 %v109
    %v112 = vunpack.c.l.bf16 %v110
    %v114 = vlaneseq
    %v115 = vshrl.u32 %v114, 7
    %v116 = vsub.s32 0, %v115
    %v117 = vrot.slane %v107, %v116
    %v119 = vsub.f32 %v111, %v117
    %v120 = vsub.f32 %v112, %v117
    %122 = vset.pattern.permute.xlu0 0
    %123 = vperm.xlu0 %122, %v105
    %v124 = vpop.permute.xlu0 %123
    %127 = vset.pattern.permute.xlu0 0
    %128 = vperm.xlu0 %127, %v106
    %v129 = vpop.permute.xlu0 %128
    %v131 = vmul.f32 %v124, %v119
    %v132 = vmul.f32 %v129, %v120
    %v133 = vadd.f32 %v117, %v131
    %v134 = vadd.f32 %v117, %v132
    %v135 = vld [vmem:[%s1] sm:$0xf]
    %v136 = vld [vmem:[%s1 + $0x4] sm:$0xf]
    %v137 = vunpack.c.l.bf16 %v135
    %v138 = vunpack.c.l.bf16 %v136
    %v140 = vlaneseq
    %v141 = vshrl.u32 %v140, 7
    %v142 = vsub.s32 0, %v141
    %v143 = vrot.slane %v108, %v142
    %v145 = vsub.f32 %v137, %v143
    %v146 = vsub.f32 %v138, %v143
    %v147 = vmul.f32 %v124, %v145
    %v148 = vmul.f32 %v129, %v146
    %v149 = vadd.f32 %v143, %v147
    %v150 = vadd.f32 %v143, %v148
    %v151 = vpack.c.bf16 %v134, %v133
    %v152 = vld [vmem:[%s5] sm:$0xff]
    %v153 = vld [vmem:[%s5 + $0x8] sm:$0xff]
    %v154 = vld [vmem:[%s5 + $0x10] sm:$0xff]
    %v155 = vld [vmem:[%s5 + $0x18] sm:$0xff]
    %v156 = vld [vmem:[%s5 + $0x20] sm:$0xff]
    %v157 = vld [vmem:[%s5 + $0x28] sm:$0xff]
    %v158 = vld [vmem:[%s5 + $0x30] sm:$0xff]
    %v159 = vld [vmem:[%s5 + $0x38] sm:$0xff]
    %v160 = vld [vmem:[%s5 + $0x40] sm:$0xff]
    %v161 = vld [vmem:[%s5 + $0x48] sm:$0xff]
    %v162 = vld [vmem:[%s5 + $0x50] sm:$0xff]
    %v163 = vld [vmem:[%s5 + $0x58] sm:$0xff]
    %v164 = vld [vmem:[%s5 + $0x60] sm:$0xff]
    %v165 = vld [vmem:[%s5 + $0x68] sm:$0xff]
    %v166 = vld [vmem:[%s5 + $0x70] sm:$0xff]
    %v167 = vld [vmem:[%s5 + $0x78] sm:$0xff]
    %v168 = vld [vmem:[%s5 + $0x80] sm:$0xff]
    %v169 = vld [vmem:[%s5 + $0x88] sm:$0xff]
    %v170 = vld [vmem:[%s5 + $0x90] sm:$0xff]
    %v171 = vld [vmem:[%s5 + $0x98] sm:$0xff]
    %v172 = vld [vmem:[%s5 + $0xa0] sm:$0xff]
    %v173 = vld [vmem:[%s5 + $0xa8] sm:$0xff]
    %v174 = vld [vmem:[%s5 + $0xb0] sm:$0xff]
    %v175 = vld [vmem:[%s5 + $0xb8] sm:$0xff]
    %v176 = vld [vmem:[%s5 + $0xc0] sm:$0xff]
    %v177 = vld [vmem:[%s5 + $0xc8] sm:$0xff]
    %v178 = vld [vmem:[%s5 + $0xd0] sm:$0xff]
    %v179 = vld [vmem:[%s5 + $0xd8] sm:$0xff]
    %v180 = vld [vmem:[%s5 + $0xe0] sm:$0xff]
    %v181 = vld [vmem:[%s5 + $0xe8] sm:$0xff]
    %v182 = vld [vmem:[%s5 + $0xf0] sm:$0xff]
    %v183 = vld [vmem:[%s5 + $0xf8] sm:$0xff]
    %v184 = vpack.c.bf16 %v150, %v149
    %v185 = vld [vmem:[#allocation2] sm:$0xff]
    %v186 = vld [vmem:[#allocation2 + $0x8] sm:$0xff]
    %v187 = vld [vmem:[#allocation2 + $0x10] sm:$0xff]
    %v188 = vld [vmem:[#allocation2 + $0x18] sm:$0xff]
    %v189 = vld [vmem:[#allocation2 + $0x20] sm:$0xff]
    %v190 = vld [vmem:[#allocation2 + $0x28] sm:$0xff]
    %v191 = vld [vmem:[#allocation2 + $0x30] sm:$0xff]
    %v192 = vld [vmem:[#allocation2 + $0x38] sm:$0xff]
    %v193 = vld [vmem:[#allocation2 + $0x40] sm:$0xff]
    %v194 = vld [vmem:[#allocation2 + $0x48] sm:$0xff]
    %v195 = vld [vmem:[#allocation2 + $0x50] sm:$0xff]
    %v196 = vld [vmem:[#allocation2 + $0x58] sm:$0xff]
    %v197 = vld [vmem:[#allocation2 + $0x60] sm:$0xff]
    %v198 = vld [vmem:[#allocation2 + $0x68] sm:$0xff]
    %v199 = vld [vmem:[#allocation2 + $0x70] sm:$0xff]
    %v200 = vld [vmem:[#allocation2 + $0x78] sm:$0xff]
    %v217 = vunpack.c.l.b16 %v185
    %v218 = vunpack.c.h.b16 %v185
    %v219 = vunpack.c.l.b16 %v186
    %v220 = vunpack.c.h.b16 %v186
    %v221 = vunpack.c.l.b16 %v187
    %v222 = vunpack.c.h.b16 %v187
    %v223 = vunpack.c.l.b16 %v188
    %v224 = vunpack.c.h.b16 %v188
    %v225 = vunpack.c.l.b16 %v189
    %v226 = vunpack.c.h.b16 %v189
    %v227 = vunpack.c.l.b16 %v190
    %v228 = vunpack.c.h.b16 %v190
    %v229 = vunpack.c.l.b16 %v191
    %v230 = vunpack.c.h.b16 %v191
    %v231 = vunpack.c.l.b16 %v192
    %v232 = vunpack.c.h.b16 %v192
    %v233 = vunpack.c.l.b16 %v193
    %v234 = vunpack.c.h.b16 %v193
    %v235 = vunpack.c.l.b16 %v194
    %v236 = vunpack.c.h.b16 %v194
    %v237 = vunpack.c.l.b16 %v195
    %v238 = vunpack.c.h.b16 %v195
    %v239 = vunpack.c.l.b16 %v196
    %v240 = vunpack.c.h.b16 %v196
    %v241 = vunpack.c.l.b16 %v197
    %v242 = vunpack.c.h.b16 %v197
    %v243 = vunpack.c.l.b16 %v198
    %v244 = vunpack.c.h.b16 %v198
    %v245 = vunpack.c.l.b16 %v199
    %v246 = vunpack.c.h.b16 %v199
    %v247 = vunpack.c.l.b16 %v200
    %v248 = vunpack.c.h.b16 %v200
    %v249 = vpack.c.b16 %v221, %v217
    %v250 = vpack.c.b16 %v222, %v218
    %v251 = vpack.c.b16 %v223, %v219
    %v252 = vpack.c.b16 %v224, %v220
    %v253 = vpack.c.b16 %v229, %v225
    %v254 = vpack.c.b16 %v230, %v226
    %v255 = vpack.c.b16 %v231, %v227
    %v256 = vpack.c.b16 %v232, %v228
    %v257 = vpack.c.b16 %v237, %v233
    %v258 = vpack.c.b16 %v238, %v234
    %v259 = vpack.c.b16 %v239, %v235
    %v260 = vpack.c.b16 %v240, %v236
    %v261 = vpack.c.b16 %v245, %v241
    %v262 = vpack.c.b16 %v246, %v242
    %v263 = vpack.c.b16 %v247, %v243
    %v264 = vpack.c.b16 %v248, %v244
    %vm281 = vcmask 523264
    %v283 = vsel %vm281, %v184, 0
    %285 = vmatprep.subr.bf16.mxu0 %v250
    %286 = vmatpush1.bf16.msra.mxu0 %v249
    %287 = vmatprep.subr.bf16.mxu0 %v254
    %288 = vmatpush1.bf16.msra.mxu0 %v253
    %289 = vmatprep.subr.bf16.mxu0 %v258
    %290 = vmatpush1.bf16.msra.mxu0 %v257
    %291 = vmatprep.subr.bf16.mxu0 %v262
    %292 = vmatpush1.bf16.msra.mxu0 %v261
    %293 = vmatprep.subr.bf16.mxu0 0
    %294 = vmatpush1.bf16.msra.mxu0 0
    %295 = vmatprep.subr.bf16.mxu0 0
    %296 = vmatpush1.bf16.msra.mxu0 0
    %297 = vmatprep.subr.bf16.mxu0 0
    %298 = vmatpush1.bf16.msra.mxu0 0
    %299 = vmatprep.subr.bf16.mxu0 0
    %300 = vmatpush1.bf16.msra.mxu0 0
    %301 = vmatprep.subr.bf16.mxu0 0
    %302 = vmatpush1.bf16.msra.mxu0 0
    %303 = vmatprep.subr.bf16.mxu0 0
    %304 = vmatpush1.bf16.msra.mxu0 0
    %305 = vmatprep.subr.bf16.mxu0 0
    %306 = vmatpush1.bf16.msra.mxu0 0
    %307 = vmatprep.subr.bf16.mxu0 0
    %308 = vmatpush1.bf16.msra.mxu0 0
    %309 = vmatprep.subr.bf16.mxu0 0
    %310 = vmatpush1.bf16.msra.mxu0 0
    %311 = vmatprep.subr.bf16.mxu0 0
    %312 = vmatpush1.bf16.msra.mxu0 0
    %313 = vmatprep.subr.bf16.mxu0 0
    %314 = vmatpush1.bf16.msra.mxu0 0
    %315 = vmatprep.subr.bf16.mxu0 0
    %316 = vmatpush1.bf16.msra.mxu0 0
    %317 = vmatprep.mubr.bf16.mxu0 0
    %318 = vmatmul.mubr.bf16.gmra.mrb[0].mxu0 %v283
    %v319 = vpop.f32.mrb[0].mxu0
    %v320 = vadd.f32 0.0, %v319
    %v321 = vpop.f32.mrb[0].mxu0
    %v322 = vadd.f32 0.0, %v321
    %v323 = vpop.f32.mrb[0].mxu0
    %v324 = vadd.f32 0.0, %v323
    %v325 = vpop.f32.mrb[0].mxu0
    %v326 = vadd.f32 0.0, %v325
    %327 = vdwg.mxu0
    %328 = vmatprep.subr.bf16.mxu0 %v252
    %329 = vmatpush1.bf16.msra.mxu0 %v251
    %330 = vmatprep.subr.bf16.mxu0 %v256
    %331 = vmatpush1.bf16.msra.mxu0 %v255
    %332 = vmatprep.subr.bf16.mxu0 %v260
    %333 = vmatpush1.bf16.msra.mxu0 %v259
    %334 = vmatprep.subr.bf16.mxu0 %v264
    %335 = vmatpush1.bf16.msra.mxu0 %v263
    %336 = vmatprep.subr.bf16.mxu0 0
    %337 = vmatpush1.bf16.msra.mxu0 0
    %338 = vmatprep.subr.bf16.mxu0 0
    %339 = vmatpush1.bf16.msra.mxu0 0
    %340 = vmatprep.subr.bf16.mxu0 0
    %341 = vmatpush1.bf16.msra.mxu0 0
    %342 = vmatprep.subr.bf16.mxu0 0
    %343 = vmatpush1.bf16.msra.mxu0 0
    %344 = vmatprep.subr.bf16.mxu0 0
    %345 = vmatpush1.bf16.msra.mxu0 0
    %346 = vmatprep.subr.bf16.mxu0 0
    %347 = vmatpush1.bf16.msra.mxu0 0
    %348 = vmatprep.subr.bf16.mxu0 0
    %349 = vmatpush1.bf16.msra.mxu0 0
    %350 = vmatprep.subr.bf16.mxu0 0
    %351 = vmatpush1.bf16.msra.mxu0 0
    %352 = vmatprep.subr.bf16.mxu0 0
    %353 = vmatpush1.bf16.msra.mxu0 0
    %354 = vmatprep.subr.bf16.mxu0 0
    %355 = vmatpush1.bf16.msra.mxu0 0
    %356 = vmatprep.subr.bf16.mxu0 0
    %357 = vmatpush1.bf16.msra.mxu0 0
    %358 = vmatprep.subr.bf16.mxu0 0
    %359 = vmatpush1.bf16.msra.mxu0 0
    %360 = vmatprep.mubr.bf16.mxu0 0
    %361 = vmatmul.mubr.bf16.gmra.mrb[0].mxu0 %v283
    %v362 = vpop.f32.mrb[0].mxu0
    %v363 = vadd.f32 0.0, %v362
    %v364 = vpop.f32.mrb[0].mxu0
    %v365 = vadd.f32 0.0, %v364
    %v366 = vpop.f32.mrb[0].mxu0
    %v367 = vadd.f32 0.0, %v366
    %v368 = vpop.f32.mrb[0].mxu0
    %v369 = vadd.f32 0.0, %v368
    %370 = vdwg.mxu0
    %v403 = vunpack.c.l.b16 %v152
    %v404 = vunpack.c.h.b16 %v152
    %v405 = vunpack.c.l.b16 %v153
    %v406 = vunpack.c.h.b16 %v153
    %v407 = vunpack.c.l.b16 %v154
    %v408 = vunpack.c.h.b16 %v154
    %v409 = vunpack.c.l.b16 %v155
    %v410 = vunpack.c.h.b16 %v155
    %v411 = vunpack.c.l.b16 %v156
    %v412 = vunpack.c.h.b16 %v156
    %v413 = vunpack.c.l.b16 %v157
    %v414 = vunpack.c.h.b16 %v157
    %v415 = vunpack.c.l.b16 %v158
    %v416 = vunpack.c.h.b16 %v158
    %v417 = vunpack.c.l.b16 %v159
    %v418 = vunpack.c.h.b16 %v159
    %v419 = vunpack.c.l.b16 %v160
    %v420 = vunpack.c.h.b16 %v160
    %v421 = vunpack.c.l.b16 %v161
    %v422 = vunpack.c.h.b16 %v161
    %v423 = vunpack.c.l.b16 %v162
    %v424 = vunpack.c.h.b16 %v162
    %v425 = vunpack.c.l.b16 %v163
    %v426 = vunpack.c.h.b16 %v163
    %v427 = vunpack.c.l.b16 %v164
    %v428 = vunpack.c.h.b16 %v164
    %v429 = vunpack.c.l.b16 %v165
    %v430 = vunpack.c.h.b16 %v165
    %v431 = vunpack.c.l.b16 %v166
    %v432 = vunpack.c.h.b16 %v166
    %v433 = vunpack.c.l.b16 %v167
    %v434 = vunpack.c.h.b16 %v167
    %v435 = vunpack.c.l.b16 %v168
    %v436 = vunpack.c.h.b16 %v168
    %v437 = vunpack.c.l.b16 %v169
    %v438 = vunpack.c.h.b16 %v169
    %v439 = vunpack.c.l.b16 %v170
    %v440 = vunpack.c.h.b16 %v170
    %v441 = vunpack.c.l.b16 %v171
    %v442 = vunpack.c.h.b16 %v171
    %v443 = vunpack.c.l.b16 %v172
    %v444 = vunpack.c.h.b16 %v172
    %v445 = vunpack.c.l.b16 %v173
    %v446 = vunpack.c.h.b16 %v173
    %v447 = vunpack.c.l.b16 %v174
    %v448 = vunpack.c.h.b16 %v174
    %v449 = vunpack.c.l.b16 %v175
    %v450 = vunpack.c.h.b16 %v175
    %v451 = vunpack.c.l.b16 %v176
    %v452 = vunpack.c.h.b16 %v176
    %v453 = vunpack.c.l.b16 %v177
    %v454 = vunpack.c.h.b16 %v177
    %v455 = vunpack.c.l.b16 %v178
    %v456 = vunpack.c.h.b16 %v178
    %v457 = vunpack.c.l.b16 %v179
    %v458 = vunpack.c.h.b16 %v179
    %v459 = vunpack.c.l.b16 %v180
    %v460 = vunpack.c.h.b16 %v180
    %v461 = vunpack.c.l.b16 %v181
    %v462 = vunpack.c.h.b16 %v181
    %v463 = vunpack.c.l.b16 %v182
    %v464 = vunpack.c.h.b16 %v182
    %v465 = vunpack.c.l.b16 %v183
    %v466 = vunpack.c.h.b16 %v183
    %v467 = vpack.c.b16 %v407, %v403
    %v468 = vpack.c.b16 %v408, %v404
    %v469 = vpack.c.b16 %v409, %v405
    %v470 = vpack.c.b16 %v410, %v406
    %v471 = vpack.c.b16 %v415, %v411
    %v472 = vpack.c.b16 %v416, %v412
    %v473 = vpack.c.b16 %v417, %v413
    %v474 = vpack.c.b16 %v418, %v414
    %v475 = vpack.c.b16 %v423, %v419
    %v476 = vpack.c.b16 %v424, %v420
    %v477 = vpack.c.b16 %v425, %v421
    %v478 = vpack.c.b16 %v426, %v422
    %v479 = vpack.c.b16 %v431, %v427
    %v480 = vpack.c.b16 %v432, %v428
    %v481 = vpack.c.b16 %v433, %v429
    %v482 = vpack.c.b16 %v434, %v430
    %v483 = vpack.c.b16 %v439, %v435
    %v484 = vpack.c.b16 %v440, %v436
    %v485 = vpack.c.b16 %v441, %v437
    %v486 = vpack.c.b16 %v442, %v438
    %v487 = vpack.c.b16 %v447, %v443
    %v488 = vpack.c.b16 %v448, %v444
    %v489 = vpack.c.b16 %v449, %v445
    %v490 = vpack.c.b16 %v450, %v446
    %v491 = vpack.c.b16 %v455, %v451
    %v492 = vpack.c.b16 %v456, %v452
    %v493 = vpack.c.b16 %v457, %v453
    %v494 = vpack.c.b16 %v458, %v454
    %v495 = vpack.c.b16 %v463, %v459
    %v496 = vpack.c.b16 %v464, %v460
    %v497 = vpack.c.b16 %v465, %v461
    %v498 = vpack.c.b16 %v466, %v462
    %531 = vmatprep.subr.bf16.mxu0 %v468
    %532 = vmatpush1.bf16.msra.mxu0 %v467
    %533 = vmatprep.subr.bf16.mxu0 %v472
    %534 = vmatpush1.bf16.msra.mxu0 %v471
    %535 = vmatprep.subr.bf16.mxu0 %v476
    %536 = vmatpush1.bf16.msra.mxu0 %v475
    %537 = vmatprep.subr.bf16.mxu0 %v480
    %538 = vmatpush1.bf16.msra.mxu0 %v479
    %539 = vmatprep.subr.bf16.mxu0 %v484
    %540 = vmatpush1.bf16.msra.mxu0 %v483
    %541 = vmatprep.subr.bf16.mxu0 %v488
    %542 = vmatpush1.bf16.msra.mxu0 %v487
    %543 = vmatprep.subr.bf16.mxu0 %v492
    %544 = vmatpush1.bf16.msra.mxu0 %v491
    %545 = vmatprep.subr.bf16.mxu0 %v496
    %546 = vmatpush1.bf16.msra.mxu0 %v495
    %547 = vmatprep.subr.bf16.mxu0 0
    %548 = vmatpush1.bf16.msra.mxu0 0
    %549 = vmatprep.subr.bf16.mxu0 0
    %550 = vmatpush1.bf16.msra.mxu0 0
    %551 = vmatprep.subr.bf16.mxu0 0
    %552 = vmatpush1.bf16.msra.mxu0 0
    %553 = vmatprep.subr.bf16.mxu0 0
    %554 = vmatpush1.bf16.msra.mxu0 0
    %555 = vmatprep.subr.bf16.mxu0 0
    %556 = vmatpush1.bf16.msra.mxu0 0
    %557 = vmatprep.subr.bf16.mxu0 0
    %558 = vmatpush1.bf16.msra.mxu0 0
    %559 = vmatprep.subr.bf16.mxu0 0
    %560 = vmatpush1.bf16.msra.mxu0 0
    %561 = vmatprep.subr.bf16.mxu0 0
    %562 = vmatpush1.bf16.msra.mxu0 0
    %563 = vmatprep.mubr.bf16.mxu0 0
    %564 = vmatmul.mubr.bf16.gmra.mrb[0].mxu0 %v151
    %v565 = vpop.f32.mrb[0].mxu0
    %v566 = vadd.f32 %v320, %v565
    %v567 = vpop.f32.mrb[0].mxu0
    %v568 = vadd.f32 %v322, %v567
    %v569 = vpop.f32.mrb[0].mxu0
    %v570 = vadd.f32 %v324, %v569
    %v571 = vpop.f32.mrb[0].mxu0
    %v572 = vadd.f32 %v326, %v571
    %573 = vdwg.mxu0
    %574 = vmatprep.subr.bf16.mxu0 %v470
    %575 = vmatpush1.bf16.msra.mxu0 %v469
    %576 = vmatprep.subr.bf16.mxu0 %v474
    %577 = vmatpush1.bf16.msra.mxu0 %v473
    %578 = vmatprep.subr.bf16.mxu0 %v478
    %579 = vmatpush1.bf16.msra.mxu0 %v477
    %580 = vmatprep.subr.bf16.mxu0 %v482
    %581 = vmatpush1.bf16.msra.mxu0 %v481
    %582 = vmatprep.subr.bf16.mxu0 %v486
    %583 = vmatpush1.bf16.msra.mxu0 %v485
    %584 = vmatprep.subr.bf16.mxu0 %v490
    %585 = vmatpush1.bf16.msra.mxu0 %v489
    %586 = vmatprep.subr.bf16.mxu0 %v494
    %587 = vmatpush1.bf16.msra.mxu0 %v493
    %588 = vmatprep.subr.bf16.mxu0 %v498
    %589 = vmatpush1.bf16.msra.mxu0 %v497
    %590 = vmatprep.subr.bf16.mxu0 0
    %591 = vmatpush1.bf16.msra.mxu0 0
    %592 = vmatprep.subr.bf16.mxu0 0
    %593 = vmatpush1.bf16.msra.mxu0 0
    %594 = vmatprep.subr.bf16.mxu0 0
    %595 = vmatpush1.bf16.msra.mxu0 0
    %596 = vmatprep.subr.bf16.mxu0 0
    %597 = vmatpush1.bf16.msra.mxu0 0
    %598 = vmatprep.subr.bf16.mxu0 0
    %599 = vmatpush1.bf16.msra.mxu0 0
    %600 = vmatprep.subr.bf16.mxu0 0
    %601 = vmatpush1.bf16.msra.mxu0 0
    %602 = vmatprep.subr.bf16.mxu0 0
    %603 = vmatpush1.bf16.msra.mxu0 0
    %604 = vmatprep.subr.bf16.mxu0 0
    %605 = vmatpush1.bf16.msra.mxu0 0
    %606 = vmatprep.mubr.bf16.mxu0 0
    %607 = vmatmul.mubr.bf16.gmra.mrb[0].mxu0 %v151
    %v608 = vpop.f32.mrb[0].mxu0
    %v609 = vadd.f32 %v363, %v608
    %v610 = vpop.f32.mrb[0].mxu0
    %v611 = vadd.f32 %v365, %v610
    %v612 = vpop.f32.mrb[0].mxu0
    %v613 = vadd.f32 %v367, %v612
    %v614 = vpop.f32.mrb[0].mxu0
    %v615 = vadd.f32 %v369, %v614
    %616 = vdwg.mxu0
    %v617 = vld [vmem:[#allocation5] sm:$0xf]
    %v619 = vlaneseq
    %v620 = vshrl.u32 %v619, 7
    %v621 = vsub.s32 0, %v620
    %v622 = vrot.slane %v617, %v621
    %v623 = vlaneseq
    %v624 = vshrl.u32 %v623, 7
    %v625 = vsub.s32 1, %v624
    %v626 = vrot.slane %v617, %v625
    %v627 = vlaneseq
    %v628 = vshrl.u32 %v627, 7
    %v629 = vsub.s32 2, %v628
    %v630 = vrot.slane %v617, %v629
    %v631 = vlaneseq
    %v632 = vshrl.u32 %v631, 7
    %v633 = vsub.s32 3, %v632
    %v634 = vrot.slane %v617, %v633
    %v639 = vadd.f32 %v566, %v622
    %v640 = vadd.f32 %v568, %v626
    %v641 = vadd.f32 %v609, %v630
    %v642 = vadd.f32 %v611, %v634
    %v643 = vadd.f32 %v570, %v622
    %v644 = vadd.f32 %v572, %v626
    %v645 = vadd.f32 %v613, %v630
    %v646 = vadd.f32 %v615, %v634
    %v647 = vxor.u32 %v639, 2147483648
    %v648 = vxor.u32 %v640, 2147483648
    %v649 = vxor.u32 %v641, 2147483648
    %v650 = vxor.u32 %v642, 2147483648
    %v651 = vxor.u32 %v643, 2147483648
    %v652 = vxor.u32 %v644, 2147483648
    %v653 = vxor.u32 %v645, 2147483648
    %v654 = vxor.u32 %v646, 2147483648
    %v655 = vmul.f32 %v647, 1.442695
    %v656 = vpow.pop %v655
    %v657 = vmul.f32 %v648, 1.442695
    %v658 = vpow.pop %v657
    %v659 = vmul.f32 %v649, 1.442695
    %v660 = vpow.pop %v659
    %v661 = vmul.f32 %v650, 1.442695
    %v662 = vpow.pop %v661
    %v663 = vmul.f32 %v651, 1.442695
    %v664 = vpow.pop %v663
    %v665 = vmul.f32 %v652, 1.442695
    %v666 = vpow.pop %v665
    %v667 = vmul.f32 %v653, 1.442695
    %v668 = vpow.pop %v667
    %v669 = vmul.f32 %v654, 1.442695
    %v670 = vpow.pop %v669
    %v671 = vadd.f32 %v656, 1.0
    %v672 = vadd.f32 %v658, 1.0
    %v673 = vadd.f32 %v660, 1.0
    %v674 = vadd.f32 %v662, 1.0
    %v675 = vadd.f32 %v664, 1.0
    %v676 = vadd.f32 %v666, 1.0
    %v677 = vadd.f32 %v668, 1.0
    %v678 = vadd.f32 %v670, 1.0
    %v679 = vrcp.pop %v671
    %v680 = vmul.f32 1.0, %v679
    %v681 = vrcp.pop %v672
    %v682 = vmul.f32 1.0, %v681
    %v683 = vrcp.pop %v673
    %v684 = vmul.f32 1.0, %v683
    %v685 = vrcp.pop %v674
    %v686 = vmul.f32 1.0, %v685
    %v687 = vrcp.pop %v675
    %v688 = vmul.f32 1.0, %v687
    %v689 = vrcp.pop %v676
    %v690 = vmul.f32 1.0, %v689
    %v691 = vrcp.pop %v677
    %v692 = vmul.f32 1.0, %v691
    %v693 = vrcp.pop %v678
    %v694 = vmul.f32 1.0, %v693
    %v695 = vmul.f32 %v639, %v680
    %v696 = vmul.f32 %v640, %v682
    %v697 = vmul.f32 %v641, %v684
    %v698 = vmul.f32 %v642, %v686
    %v699 = vmul.f32 %v643, %v688
    %v700 = vmul.f32 %v644, %v690
    %v701 = vmul.f32 %v645, %v692
    %v702 = vmul.f32 %v646, %v694
    %v703 = vpack.c.bf16 %v699, %v695
    %v704 = vpack.c.bf16 %v700, %v696
    %v705 = vpack.c.bf16 %v701, %v697
    %v706 = vpack.c.bf16 %v702, %v698
    %v707 = vld [vmem:[#allocation7] sm:$0xff]
    %v708 = vld [vmem:[#allocation7 + $0x8] sm:$0xff]
    %v709 = vld [vmem:[#allocation7 + $0x10] sm:$0xff]
    %v710 = vld [vmem:[#allocation7 + $0x18] sm:$0xff]
    %v711 = vld [vmem:[#allocation7 + $0x20] sm:$0xff]
    %v712 = vld [vmem:[#allocation7 + $0x28] sm:$0xff]
    %v713 = vld [vmem:[#allocation7 + $0x30] sm:$0xff]
    %v714 = vld [vmem:[#allocation7 + $0x38] sm:$0xff]
    %v715 = vld [vmem:[#allocation7 + $0x40] sm:$0xff]
    %v716 = vld [vmem:[#allocation7 + $0x48] sm:$0xff]
    %v717 = vld [vmem:[#allocation7 + $0x50] sm:$0xff]
    %v718 = vld [vmem:[#allocation7 + $0x58] sm:$0xff]
    %v719 = vld [vmem:[#allocation7 + $0x60] sm:$0xff]
    %v720 = vld [vmem:[#allocation7 + $0x68] sm:$0xff]
    %v721 = vld [vmem:[#allocation7 + $0x70] sm:$0xff]
    %v722 = vld [vmem:[#allocation7 + $0x78] sm:$0xff]
    %v723 = vld [vmem:[#allocation7 + $0x80] sm:$0xff]
    %v724 = vld [vmem:[#allocation7 + $0x88] sm:$0xff]
    %v725 = vld [vmem:[#allocation7 + $0x90] sm:$0xff]
    %v726 = vld [vmem:[#allocation7 + $0x98] sm:$0xff]
    %v727 = vld [vmem:[#allocation7 + $0xa0] sm:$0xff]
    %v728 = vld [vmem:[#allocation7 + $0xa8] sm:$0xff]
    %v729 = vld [vmem:[#allocation7 + $0xb0] sm:$0xff]
    %v730 = vld [vmem:[#allocation7 + $0xb8] sm:$0xff]
    %v731 = vld [vmem:[#allocation7 + $0xc0] sm:$0xff]
    %v732 = vld [vmem:[#allocation7 + $0xc8] sm:$0xff]
    %v733 = vld [vmem:[#allocation7 + $0xd0] sm:$0xff]
    %v734 = vld [vmem:[#allocation7 + $0xd8] sm:$0xff]
    %v735 = vld [vmem:[#allocation7 + $0xe0] sm:$0xff]
    %v736 = vld [vmem:[#allocation7 + $0xe8] sm:$0xff]
    %v737 = vld [vmem:[#allocation7 + $0xf0] sm:$0xff]
    %v738 = vld [vmem:[#allocation7 + $0xf8] sm:$0xff]
    %v739 = vld [vmem:[#allocation7 + $0x100] sm:$0xff]
    %v740 = vld [vmem:[#allocation7 + $0x108] sm:$0xff]
    %v741 = vld [vmem:[#allocation7 + $0x110] sm:$0xff]
    %v742 = vld [vmem:[#allocation7 + $0x118] sm:$0xff]
    %v743 = vld [vmem:[#allocation7 + $0x120] sm:$0xff]
    %v744 = vld [vmem:[#allocation7 + $0x128] sm:$0xff]
    %v745 = vld [vmem:[#allocation7 + $0x130] sm:$0xff]
    %v746 = vld [vmem:[#allocation7 + $0x138] sm:$0xff]
    %v747 = vld [vmem:[#allocation7 + $0x140] sm:$0xff]
    %v748 = vld [vmem:[#allocation7 + $0x148] sm:$0xff]
    %v749 = vld [vmem:[#allocation7 + $0x150] sm:$0xff]
    %v750 = vld [vmem:[#allocation7 + $0x158] sm:$0xff]
    %v751 = vld [vmem:[#allocation7 + $0x160] sm:$0xff]
    %v752 = vld [vmem:[#allocation7 + $0x168] sm:$0xff]
    %v753 = vld [vmem:[#allocation7 + $0x170] sm:$0xff]
    %v754 = vld [vmem:[#allocation7 + $0x178] sm:$0xff]
    %v755 = vld [vmem:[#allocation7 + $0x180] sm:$0xff]
    %v756 = vld [vmem:[#allocation7 + $0x188] sm:$0xff]
    %v757 = vld [vmem:[#allocation7 + $0x190] sm:$0xff]
    %v758 = vld [vmem:[#allocation7 + $0x198] sm:$0xff]
    %v759 = vld [vmem:[#allocation7 + $0x1a0] sm:$0xff]
    %v760 = vld [vmem:[#allocation7 + $0x1a8] sm:$0xff]
    %v761 = vld [vmem:[#allocation7 + $0x1b0] sm:$0xff]
    %v762 = vld [vmem:[#allocation7 + $0x1b8] sm:$0xff]
    %v763 = vld [vmem:[#allocation7 + $0x1c0] sm:$0xff]
    %v764 = vld [vmem:[#allocation7 + $0x1c8] sm:$0xff]
    %v765 = vld [vmem:[#allocation7 + $0x1d0] sm:$0xff]
    %v766 = vld [vmem:[#allocation7 + $0x1d8] sm:$0xff]
    %v767 = vld [vmem:[#allocation7 + $0x1e0] sm:$0xff]
    %v768 = vld [vmem:[#allocation7 + $0x1e8] sm:$0xff]
    %v769 = vld [vmem:[#allocation7 + $0x1f0] sm:$0xff]
    %v770 = vld [vmem:[#allocation7 + $0x1f8] sm:$0xff]
    %v771 = vld [vmem:[#allocation7 + $0x200] sm:$0xff]
    %v772 = vld [vmem:[#allocation7 + $0x208] sm:$0xff]
    %v773 = vld [vmem:[#allocation7 + $0x210] sm:$0xff]
    %v774 = vld [vmem:[#allocation7 + $0x218] sm:$0xff]
    %v775 = vld [vmem:[#allocation7 + $0x220] sm:$0xff]
    %v776 = vld [vmem:[#allocation7 + $0x228] sm:$0xff]
    %v777 = vld [vmem:[#allocation7 + $0x230] sm:$0xff]
    %v778 = vld [vmem:[#allocation7 + $0x238] sm:$0xff]
    %v779 = vld [vmem:[#allocation7 + $0x240] sm:$0xff]
    %v780 = vld [vmem:[#allocation7 + $0x248] sm:$0xff]
    %v781 = vld [vmem:[#allocation7 + $0x250] sm:$0xff]
    %v782 = vld [vmem:[#allocation7 + $0x258] sm:$0xff]
    %v783 = vld [vmem:[#allocation7 + $0x260] sm:$0xff]
    %v784 = vld [vmem:[#allocation7 + $0x268] sm:$0xff]
    %v785 = vld [vmem:[#allocation7 + $0x270] sm:$0xff]
    %v786 = vld [vmem:[#allocation7 + $0x278] sm:$0xff]
    %v787 = vld [vmem:[#allocation7 + $0x280] sm:$0xff]
    %v788 = vld [vmem:[#allocation7 + $0x288] sm:$0xff]
    %v789 = vld [vmem:[#allocation7 + $0x290] sm:$0xff]
    %v790 = vld [vmem:[#allocation7 + $0x298] sm:$0xff]
    %v791 = vld [vmem:[#allocation7 + $0x2a0] sm:$0xff]
    %v792 = vld [vmem:[#allocation7 + $0x2a8] sm:$0xff]
    %v793 = vld [vmem:[#allocation7 + $0x2b0] sm:$0xff]
    %v794 = vld [vmem:[#allocation7 + $0x2b8] sm:$0xff]
    %v795 = vld [vmem:[#allocation7 + $0x2c0] sm:$0xff]
    %v796 = vld [vmem:[#allocation7 + $0x2c8] sm:$0xff]
    %v797 = vld [vmem:[#allocation7 + $0x2d0] sm:$0xff]
    %v798 = vld [vmem:[#allocation7 + $0x2d8] sm:$0xff]
    %v799 = vld [vmem:[#allocation7 + $0x2e0] sm:$0xff]
    %v800 = vld [vmem:[#allocation7 + $0x2e8] sm:$0xff]
    %v801 = vld [vmem:[#allocation7 + $0x2f0] sm:$0xff]
    %v802 = vld [vmem:[#allocation7 + $0x2f8] sm:$0xff]
    %v803 = vld [vmem:[#allocation7 + $0x300] sm:$0xff]
    %v804 = vld [vmem:[#allocation7 + $0x308] sm:$0xff]
    %v805 = vld [vmem:[#allocation7 + $0x310] sm:$0xff]
    %v806 = vld [vmem:[#allocation7 + $0x318] sm:$0xff]
    %v807 = vld [vmem:[#allocation7 + $0x320] sm:$0xff]
    %v808 = vld [vmem:[#allocation7 + $0x328] sm:$0xff]
    %v809 = vld [vmem:[#allocation7 + $0x330] sm:$0xff]
    %v810 = vld [vmem:[#allocation7 + $0x338] sm:$0xff]
    %v811 = vld [vmem:[#allocation7 + $0x340] sm:$0xff]
    %v812 = vld [vmem:[#allocation7 + $0x348] sm:$0xff]
    %v813 = vld [vmem:[#allocation7 + $0x350] sm:$0xff]
    %v814 = vld [vmem:[#allocation7 + $0x358] sm:$0xff]
    %v815 = vld [vmem:[#allocation7 + $0x360] sm:$0xff]
    %v816 = vld [vmem:[#allocation7 + $0x368] sm:$0xff]
    %v817 = vld [vmem:[#allocation7 + $0x370] sm:$0xff]
    %v818 = vld [vmem:[#allocation7 + $0x378] sm:$0xff]
    %v819 = vld [vmem:[#allocation7 + $0x380] sm:$0xff]
    %v820 = vld [vmem:[#allocation7 + $0x388] sm:$0xff]
    %v821 = vld [vmem:[#allocation7 + $0x390] sm:$0xff]
    %v822 = vld [vmem:[#allocation7 + $0x398] sm:$0xff]
    %v823 = vld [vmem:[#allocation7 + $0x3a0] sm:$0xff]
    %v824 = vld [vmem:[#allocation7 + $0x3a8] sm:$0xff]
    %v825 = vld [vmem:[#allocation7 + $0x3b0] sm:$0xff]
    %v826 = vld [vmem:[#allocation7 + $0x3b8] sm:$0xff]
    %v827 = vld [vmem:[#allocation7 + $0x3c0] sm:$0xff]
    %v828 = vld [vmem:[#allocation7 + $0x3c8] sm:$0xff]
    %v829 = vld [vmem:[#allocation7 + $0x3d0] sm:$0xff]
    %v830 = vld [vmem:[#allocation7 + $0x3d8] sm:$0xff]
    %v831 = vld [vmem:[#allocation7 + $0x3e0] sm:$0xff]
    %v832 = vld [vmem:[#allocation7 + $0x3e8] sm:$0xff]
    %v833 = vld [vmem:[#allocation7 + $0x3f0] sm:$0xff]
    %v834 = vld [vmem:[#allocation7 + $0x3f8] sm:$0xff]
    %v835 = vld [vmem:[#allocation8] sm:$0xf]
    %v837 = vlaneseq
    %v838 = vshrl.u32 %v837, 7
    %v839 = vsub.s32 0, %v838
    %v840 = vrot.slane %v835, %v839
    %v841 = vlaneseq
    %v842 = vshrl.u32 %v841, 7
    %v843 = vsub.s32 1, %v842
    %v844 = vrot.slane %v835, %v843
    %v845 = vlaneseq
    %v846 = vshrl.u32 %v845, 7
    %v847 = vsub.s32 2, %v846
    %v848 = vrot.slane %v835, %v847
    %v849 = vlaneseq
    %v850 = vshrl.u32 %v849, 7
    %v851 = vsub.s32 3, %v850
    %v852 = vrot.slane %v835, %v851
    %v985 = vunpack.c.l.b16 %v707
    %v986 = vunpack.c.h.b16 %v707
    %v987 = vunpack.c.l.b16 %v708
    %v988 = vunpack.c.h.b16 %v708
    %v989 = vunpack.c.l.b16 %v709
    %v990 = vunpack.c.h.b16 %v709
    %v991 = vunpack.c.l.b16 %v710
    %v992 = vunpack.c.h.b16 %v710
    %v993 = vunpack.c.l.b16 %v711
    %v994 = vunpack.c.h.b16 %v711
    %v995 = vunpack.c.l.b16 %v712
    %v996 = vunpack.c.h.b16 %v712
    %v997 = vunpack.c.l.b16 %v713
    %v998 = vunpack.c.h.b16 %v713
    %v999 = vunpack.c.l.b16 %v714
    %v1000 = vunpack.c.h.b16 %v714
    %v1001 = vunpack.c.l.b16 %v715
    %v1002 = vunpack.c.h.b16 %v715
    %v1003 = vunpack.c.l.b16 %v716
    %v1004 = vunpack.c.h.b16 %v716
    %v1005 = vunpack.c.l.b16 %v717
    %v1006 = vunpack.c.h.b16 %v717
    %v1007 = vunpack.c.l.b16 %v718
    %v1008 = vunpack.c.h.b16 %v718
    %v1009 = vunpack.c.l.b16 %v719
    %v1010 = vunpack.c.h.b16 %v719
    %v1011 = vunpack.c.l.b16 %v720
    %v1012 = vunpack.c.h.b16 %v720
    %v1013 = vunpack.c.l.b16 %v721
    %v1014 = vunpack.c.h.b16 %v721
    %v1015 = vunpack.c.l.b16 %v722
    %v1016 = vunpack.c.h.b16 %v722
    %v1017 = vunpack.c.l.b16 %v723
    %v1018 = vunpack.c.h.b16 %v723
    %v1019 = vunpack.c.l.b16 %v724
    %v1020 = vunpack.c.h.b16 %v724
    %v1021 = vunpack.c.l.b16 %v725
    %v1022 = vunpack.c.h.b16 %v725
    %v1023 = vunpack.c.l.b16 %v726
    %v1024 = vunpack.c.h.b16 %v726
    %v1025 = vunpack.c.l.b16 %v727
    %v1026 = vunpack.c.h.b16 %v727
    %v1027 = vunpack.c.l.b16 %v728
    %v1028 = vunpack.c.h.b16 %v728
    %v1029 = vunpack.c.l.b16 %v729
    %v1030 = vunpack.c.h.b16 %v729
    %v1031 = vunpack.c.l.b16 %v730
    %v1032 = vunpack.c.h.b16 %v730
    %v1033 = vunpack.c.l.b16 %v731
    %v1034 = vunpack.c.h.b16 %v731
    %v1035 = vunpack.c.l.b16 %v732
    %v1036 = vunpack.c.h.b16 %v732
    %v1037 = vunpack.c.l.b16 %v733
    %v1038 = vunpack.c.h.b16 %v733
    %v1039 = vunpack.c.l.b16 %v734
    %v1040 = vunpack.c.h.b16 %v734
    %v1041 = vunpack.c.l.b16 %v735
    %v1042 = vunpack.c.h.b16 %v735
    %v1043 = vunpack.c.l.b16 %v736
    %v1044 = vunpack.c.h.b16 %v736
    %v1045 = vunpack.c.l.b16 %v737
    %v1046 = vunpack.c.h.b16 %v737
    %v1047 = vunpack.c.l.b16 %v738
    %v1048 = vunpack.c.h.b16 %v738
    %v1049 = vunpack.c.l.b16 %v739
    %v1050 = vunpack.c.h.b16 %v739
    %v1051 = vunpack.c.l.b16 %v740
    %v1052 = vunpack.c.h.b16 %v740
    %v1053 = vunpack.c.l.b16 %v741
    %v1054 = vunpack.c.h.b16 %v741
    %v1055 = vunpack.c.l.b16 %v742
    %v1056 = vunpack.c.h.b16 %v742
    %v1057 = vunpack.c.l.b16 %v743
    %v1058 = vunpack.c.h.b16 %v743
    %v1059 = vunpack.c.l.b16 %v744
    %v1060 = vunpack.c.h.b16 %v744
    %v1061 = vunpack.c.l.b16 %v745
    %v1062 = vunpack.c.h.b16 %v745
    %v1063 = vunpack.c.l.b16 %v746
    %v1064 = vunpack.c.h.b16 %v746
    %v1065 = vunpack.c.l.b16 %v747
    %v1066 = vunpack.c.h.b16 %v747
    %v1067 = vunpack.c.l.b16 %v748
    %v1068 = vunpack.c.h.b16 %v748
    %v1069 = vunpack.c.l.b16 %v749
    %v1070 = vunpack.c.h.b16 %v749
    %v1071 = vunpack.c.l.b16 %v750
    %v1072 = vunpack.c.h.b16 %v750
    %v1073 = vunpack.c.l.b16 %v751
    %v1074 = vunpack.c.h.b16 %v751
    %v1075 = vunpack.c.l.b16 %v752
    %v1076 = vunpack.c.h.b16 %v752
    %v1077 = vunpack.c.l.b16 %v753
    %v1078 = vunpack.c.h.b16 %v753
    %v1079 = vunpack.c.l.b16 %v754
    %v1080 = vunpack.c.h.b16 %v754
    %v1081 = vunpack.c.l.b16 %v755
    %v1082 = vunpack.c.h.b16 %v755
    %v1083 = vunpack.c.l.b16 %v756
    %v1084 = vunpack.c.h.b16 %v756
    %v1085 = vunpack.c.l.b16 %v757
    %v1086 = vunpack.c.h.b16 %v757
    %v1087 = vunpack.c.l.b16 %v758
    %v1088 = vunpack.c.h.b16 %v758
    %v1089 = vunpack.c.l.b16 %v759
    %v1090 = vunpack.c.h.b16 %v759
    %v1091 = vunpack.c.l.b16 %v760
    %v1092 = vunpack.c.h.b16 %v760
    %v1093 = vunpack.c.l.b16 %v761
    %v1094 = vunpack.c.h.b16 %v761
    %v1095 = vunpack.c.l.b16 %v762
    %v1096 = vunpack.c.h.b16 %v762
    %v1097 = vunpack.c.l.b16 %v763
    %v1098 = vunpack.c.h.b16 %v763
    %v1099 = vunpack.c.l.b16 %v764
    %v1100 = vunpack.c.h.b16 %v764
    %v1101 = vunpack.c.l.b16 %v765
    %v1102 = vunpack.c.h.b16 %v765
    %v1103 = vunpack.c.l.b16 %v766
    %v1104 = vunpack.c.h.b16 %v766
    %v1105 = vunpack.c.l.b16 %v767
    %v1106 = vunpack.c.h.b16 %v767
    %v1107 = vunpack.c.l.b16 %v768
    %v1108 = vunpack.c.h.b16 %v768
    %v1109 = vunpack.c.l.b16 %v769
    %v1110 = vunpack.c.h.b16 %v769
    %v1111 = vunpack.c.l.b16 %v770
    %v1112 = vunpack.c.h.b16 %v770
    %v1113 = vunpack.c.l.b16 %v771
    %v1114 = vunpack.c.h.b16 %v771
    %v1115 = vunpack.c.l.b16 %v772
    %v1116 = vunpack.c.h.b16 %v772
    %v1117 = vunpack.c.l.b16 %v773
    %v1118 = vunpack.c.h.b16 %v773
    %v1119 = vunpack.c.l.b16 %v774
    %v1120 = vunpack.c.h.b16 %v774
    %v1121 = vunpack.c.l.b16 %v775
    %v1122 = vunpack.c.h.b16 %v775
    %v1123 = vunpack.c.l.b16 %v776
    %v1124 = vunpack.c.h.b16 %v776
    %v1125 = vunpack.c.l.b16 %v777
    %v1126 = vunpack.c.h.b16 %v777
    %v1127 = vunpack.c.l.b16 %v778
    %v1128 = vunpack.c.h.b16 %v778
    %v1129 = vunpack.c.l.b16 %v779
    %v1130 = vunpack.c.h.b16 %v779
    %v1131 = vunpack.c.l.b16 %v780
    %v1132 = vunpack.c.h.b16 %v780
    %v1133 = vunpack.c.l.b16 %v781
    %v1134 = vunpack.c.h.b16 %v781
    %v1135 = vunpack.c.l.b16 %v782
    %v1136 = vunpack.c.h.b16 %v782
    %v1137 = vunpack.c.l.b16 %v783
    %v1138 = vunpack.c.h.b16 %v783
    %v1139 = vunpack.c.l.b16 %v784
    %v1140 = vunpack.c.h.b16 %v784
    %v1141 = vunpack.c.l.b16 %v785
    %v1142 = vunpack.c.h.b16 %v785
    %v1143 = vunpack.c.l.b16 %v786
    %v1144 = vunpack.c.h.b16 %v786
    %v1145 = vunpack.c.l.b16 %v787
    %v1146 = vunpack.c.h.b16 %v787
    %v1147 = vunpack.c.l.b16 %v788
    %v1148 = vunpack.c.h.b16 %v788
    %v1149 = vunpack.c.l.b16 %v789
    %v1150 = vunpack.c.h.b16 %v789
    %v1151 = vunpack.c.l.b16 %v790
    %v1152 = vunpack.c.h.b16 %v790
    %v1153 = vunpack.c.l.b16 %v791
    %v1154 = vunpack.c.h.b16 %v791
    %v1155 = vunpack.c.l.b16 %v792
    %v1156 = vunpack.c.h.b16 %v792
    %v1157 = vunpack.c.l.b16 %v793
    %v1158 = vunpack.c.h.b16 %v793
    %v1159 = vunpack.c.l.b16 %v794
    %v1160 = vunpack.c.h.b16 %v794
    %v1161 = vunpack.c.l.b16 %v795
    %v1162 = vunpack.c.h.b16 %v795
    %v1163 = vunpack.c.l.b16 %v796
    %v1164 = vunpack.c.h.b16 %v796
    %v1165 = vunpack.c.l.b16 %v797
    %v1166 = vunpack.c.h.b16 %v797
    %v1167 = vunpack.c.l.b16 %v798
    %v1168 = vunpack.c.h.b16 %v798
    %v1169 = vunpack.c.l.b16 %v799
    %v1170 = vunpack.c.h.b16 %v799
    %v1171 = vunpack.c.l.b16 %v800
    %v1172 = vunpack.c.h.b16 %v800
    %v1173 = vunpack.c.l.b16 %v801
    %v1174 = vunpack.c.h.b16 %v801
    %v1175 = vunpack.c.l.b16 %v802
    %v1176 = vunpack.c.h.b16 %v802
    %v1177 = vunpack.c.l.b16 %v803
    %v1178 = vunpack.c.h.b16 %v803
    %v1179 = vunpack.c.l.b16 %v804
    %v1180 = vunpack.c.h.b16 %v804
    %v1181 = vunpack.c.l.b16 %v805
    %v1182 = vunpack.c.h.b16 %v805
    %v1183 = vunpack.c.l.b16 %v806
    %v1184 = vunpack.c.h.b16 %v806
    %v1185 = vunpack.c.l.b16 %v807
    %v1186 = vunpack.c.h.b16 %v807
    %v1187 = vunpack.c.l.b16 %v808
    %v1188 = vunpack.c.h.b16 %v808
    %v1189 = vunpack.c.l.b16 %v809
    %v1190 = vunpack.c.h.b16 %v809
    %v1191 = vunpack.c.l.b16 %v810
    %v1192 = vunpack.c.h.b16 %v810
    %v1193 = vunpack.c.l.b16 %v811
    %v1194 = vunpack.c.h.b16 %v811
    %v1195 = vunpack.c.l.b16 %v812
    %v1196 = vunpack.c.h.b16 %v812
    %v1197 = vunpack.c.l.b16 %v813
    %v1198 = vunpack.c.h.b16 %v813
    %v1199 = vunpack.c.l.b16 %v814
    %v1200 = vunpack.c.h.b16 %v814
    %v1201 = vunpack.c.l.b16 %v815
    %v1202 = vunpack.c.h.b16 %v815
    %v1203 = vunpack.c.l.b16 %v816
    %v1204 = vunpack.c.h.b16 %v816
    %v1205 = vunpack.c.l.b16 %v817
    %v1206 = vunpack.c.h.b16 %v817
    %v1207 = vunpack.c.l.b16 %v818
    %v1208 = vunpack.c.h.b16 %v818
    %v1209 = vunpack.c.l.b16 %v819
    %v1210 = vunpack.c.h.b16 %v819
    %v1211 = vunpack.c.l.b16 %v820
    %v1212 = vunpack.c.h.b16 %v820
    %v1213 = vunpack.c.l.b16 %v821
    %v1214 = vunpack.c.h.b16 %v821
    %v1215 = vunpack.c.l.b16 %v822
    %v1216 = vunpack.c.h.b16 %v822
    %v1217 = vunpack.c.l.b16 %v823
    %v1218 = vunpack.c.h.b16 %v823
    %v1219 = vunpack.c.l.b16 %v824
    %v1220 = vunpack.c.h.b16 %v824
    %v1221 = vunpack.c.l.b16 %v825
    %v1222 = vunpack.c.h.b16 %v825
    %v1223 = vunpack.c.l.b16 %v826
    %v1224 = vunpack.c.h.b16 %v826
    %v1225 = vunpack.c.l.b16 %v827
    %v1226 = vunpack.c.h.b16 %v827
    %v1227 = vunpack.c.l.b16 %v828
    %v1228 = vunpack.c.h.b16 %v828
    %v1229 = vunpack.c.l.b16 %v829
    %v1230 = vunpack.c.h.b16 %v829
    %v1231 = vunpack.c.l.b16 %v830
    %v1232 = vunpack.c.h.b16 %v830
    %v1233 = vunpack.c.l.b16 %v831
    %v1234 = vunpack.c.h.b16 %v831
    %v1235 = vunpack.c.l.b16 %v832
    %v1236 = vunpack.c.h.b16 %v832
    %v1237 = vunpack.c.l.b16 %v833
    %v1238 = vunpack.c.h.b16 %v833
    %v1239 = vunpack.c.l.b16 %v834
    %v1240 = vunpack.c.h.b16 %v834
    %v1241 = vpack.c.b16 %v989, %v985
    %v1242 = vpack.c.b16 %v990, %v986
    %v1243 = vpack.c.b16 %v991, %v987
    %v1244 = vpack.c.b16 %v992, %v988
    %v1245 = vpack.c.b16 %v997, %v993
    %v1246 = vpack.c.b16 %v998, %v994
    %v1247 = vpack.c.b16 %v999, %v995
    %v1248 = vpack.c.b16 %v1000, %v996
    %v1249 = vpack.c.b16 %v1005, %v1001
    %v1250 = vpack.c.b16 %v1006, %v1002
    %v1251 = vpack.c.b16 %v1007, %v1003
    %v1252 = vpack.c.b16 %v1008, %v1004
    %v1253 = vpack.c.b16 %v1013, %v1009
    %v1254 = vpack.c.b16 %v1014, %v1010
    %v1255 = vpack.c.b16 %v1015, %v1011
    %v1256 = vpack.c.b16 %v1016, %v1012
    %v1257 = vpack.c.b16 %v1021, %v1017
    %v1258 = vpack.c.b16 %v1022, %v1018
    %v1259 = vpack.c.b16 %v1023, %v1019
    %v1260 = vpack.c.b16 %v1024, %v1020
    %v1261 = vpack.c.b16 %v1029, %v1025
    %v1262 = vpack.c.b16 %v1030, %v1026
    %v1263 = vpack.c.b16 %v1031, %v1027
    %v1264 = vpack.c.b16 %v1032, %v1028
    %v1265 = vpack.c.b16 %v1037, %v1033
    %v1266 = vpack.c.b16 %v1038, %v1034
    %v1267 = vpack.c.b16 %v1039, %v1035
    %v1268 = vpack.c.b16 %v1040, %v1036
    %v1269 = vpack.c.b16 %v1045, %v1041
    %v1270 = vpack.c.b16 %v1046, %v1042
    %v1271 = vpack.c.b16 %v1047, %v1043
    %v1272 = vpack.c.b16 %v1048, %v1044
    %v1273 = vpack.c.b16 %v1053, %v1049
    %v1274 = vpack.c.b16 %v1054, %v1050
    %v1275 = vpack.c.b16 %v1055, %v1051
    %v1276 = vpack.c.b16 %v1056, %v1052
    %v1277 = vpack.c.b16 %v1061, %v1057
    %v1278 = vpack.c.b16 %v1062, %v1058
    %v1279 = vpack.c.b16 %v1063, %v1059
    %v1280 = vpack.c.b16 %v1064, %v1060
    %v1281 = vpack.c.b16 %v1069, %v1065
    %v1282 = vpack.c.b16 %v1070, %v1066
    %v1283 = vpack.c.b16 %v1071, %v1067
    %v1284 = vpack.c.b16 %v1072, %v1068
    %v1285 = vpack.c.b16 %v1077, %v1073
    %v1286 = vpack.c.b16 %v1078, %v1074
    %v1287 = vpack.c.b16 %v1079, %v1075
    %v1288 = vpack.c.b16 %v1080, %v1076
    %v1289 = vpack.c.b16 %v1085, %v1081
    %v1290 = vpack.c.b16 %v1086, %v1082
    %v1291 = vpack.c.b16 %v1087, %v1083
    %v1292 = vpack.c.b16 %v1088, %v1084
    %v1293 = vpack.c.b16 %v1093, %v1089
    %v1294 = vpack.c.b16 %v1094, %v1090
    %v1295 = vpack.c.b16 %v1095, %v1091
    %v1296 = vpack.c.b16 %v1096, %v1092
    %v1297 = vpack.c.b16 %v1101, %v1097
    %v1298 = vpack.c.b16 %v1102, %v1098
    %v1299 = vpack.c.b16 %v1103, %v1099
    %v1300 = vpack.c.b16 %v1104, %v1100
    %v1301 = vpack.c.b16 %v1109, %v1105
    %v1302 = vpack.c.b16 %v1110, %v1106
    %v1303 = vpack.c.b16 %v1111, %v1107
    %v1304 = vpack.c.b16 %v1112, %v1108
    %v1305 = vpack.c.b16 %v1117, %v1113
    %v1306 = vpack.c.b16 %v1118, %v1114
    %v1307 = vpack.c.b16 %v1119, %v1115
    %v1308 = vpack.c.b16 %v1120, %v1116
    %v1309 = vpack.c.b16 %v1125, %v1121
    %v1310 = vpack.c.b16 %v1126, %v1122
    %v1311 = vpack.c.b16 %v1127, %v1123
    %v1312 = vpack.c.b16 %v1128, %v1124
    %v1313 = vpack.c.b16 %v1133, %v1129
    %v1314 = vpack.c.b16 %v1134, %v1130
    %v1315 = vpack.c.b16 %v1135, %v1131
    %v1316 = vpack.c.b16 %v1136, %v1132
    %v1317 = vpack.c.b16 %v1141, %v1137
    %v1318 = vpack.c.b16 %v1142, %v1138
    %v1319 = vpack.c.b16 %v1143, %v1139
    %v1320 = vpack.c.b16 %v1144, %v1140
    %v1321 = vpack.c.b16 %v1149, %v1145
    %v1322 = vpack.c.b16 %v1150, %v1146
    %v1323 = vpack.c.b16 %v1151, %v1147
    %v1324 = vpack.c.b16 %v1152, %v1148
    %v1325 = vpack.c.b16 %v1157, %v1153
    %v1326 = vpack.c.b16 %v1158, %v1154
    %v1327 = vpack.c.b16 %v1159, %v1155
    %v1328 = vpack.c.b16 %v1160, %v1156
    %v1329 = vpack.c.b16 %v1165, %v1161
    %v1330 = vpack.c.b16 %v1166, %v1162
    %v1331 = vpack.c.b16 %v1167, %v1163
    %v1332 = vpack.c.b16 %v1168, %v1164
    %v1333 = vpack.c.b16 %v1173, %v1169
    %v1334 = vpack.c.b16 %v1174, %v1170
    %v1335 = vpack.c.b16 %v1175, %v1171
    %v1336 = vpack.c.b16 %v1176, %v1172
    %v1337 = vpack.c.b16 %v1181, %v1177
    %v1338 = vpack.c.b16 %v1182, %v1178
    %v1339 = vpack.c.b16 %v1183, %v1179
    %v1340 = vpack.c.b16 %v1184, %v1180
    %v1341 = vpack.c.b16 %v1189, %v1185
    %v1342 = vpack.c.b16 %v1190, %v1186
    %v1343 = vpack.c.b16 %v1191, %v1187
    %v1344 = vpack.c.b16 %v1192, %v1188
    %v1345 = vpack.c.b16 %v1197, %v1193
    %v1346 = vpack.c.b16 %v1198, %v1194
    %v1347 = vpack.c.b16 %v1199, %v1195
    %v1348 = vpack.c.b16 %v1200, %v1196
    %v1349 = vpack.c.b16 %v1205, %v1201
    %v1350 = vpack.c.b16 %v1206, %v1202
    %v1351 = vpack.c.b16 %v1207, %v1203
    %v1352 = vpack.c.b16 %v1208, %v1204
    %v1353 = vpack.c.b16 %v1213, %v1209
    %v1354 = vpack.c.b16 %v1214, %v1210
    %v1355 = vpack.c.b16 %v1215, %v1211
    %v1356 = vpack.c.b16 %v1216, %v1212
    %v1357 = vpack.c.b16 %v1221, %v1217
    %v1358 = vpack.c.b16 %v1222, %v1218
    %v1359 = vpack.c.b16 %v1223, %v1219
    %v1360 = vpack.c.b16 %v1224, %v1220
    %v1361 = vpack.c.b16 %v1229, %v1225
    %v1362 = vpack.c.b16 %v1230, %v1226
    %v1363 = vpack.c.b16 %v1231, %v1227
    %v1364 = vpack.c.b16 %v1232, %v1228
    %v1365 = vpack.c.b16 %v1237, %v1233
    %v1366 = vpack.c.b16 %v1238, %v1234
    %v1367 = vpack.c.b16 %v1239, %v1235
    %v1368 = vpack.c.b16 %v1240, %v1236
    %1497 = vmatprep.subr.bf16.mxu0 %v1242
    %1498 = vmatpush1.bf16.msra.mxu0 %v1241
    %1499 = vmatprep.subr.bf16.mxu0 %v1246
    %1500 = vmatpush1.bf16.msra.mxu0 %v1245
    %1501 = vmatprep.subr.bf16.mxu0 %v1250
    %1502 = vmatpush1.bf16.msra.mxu0 %v1249
    %1503 = vmatprep.subr.bf16.mxu0 %v1254
    %1504 = vmatpush1.bf16.msra.mxu0 %v1253
    %1505 = vmatprep.subr.bf16.mxu0 %v1258
    %1506 = vmatpush1.bf16.msra.mxu0 %v1257
    %1507 = vmatprep.subr.bf16.mxu0 %v1262
    %1508 = vmatpush1.bf16.msra.mxu0 %v1261
    %1509 = vmatprep.subr.bf16.mxu0 %v1266
    %1510 = vmatpush1.bf16.msra.mxu0 %v1265
    %1511 = vmatprep.subr.bf16.mxu0 %v1270
    %1512 = vmatpush1.bf16.msra.mxu0 %v1269
    %1513 = vmatprep.subr.bf16.mxu0 %v1274
    %1514 = vmatpush1.bf16.msra.mxu0 %v1273
    %1515 = vmatprep.subr.bf16.mxu0 %v1278
    %1516 = vmatpush1.bf16.msra.mxu0 %v1277
    %1517 = vmatprep.subr.bf16.mxu0 %v1282
    %1518 = vmatpush1.bf16.msra.mxu0 %v1281
    %1519 = vmatprep.subr.bf16.mxu0 %v1286
    %1520 = vmatpush1.bf16.msra.mxu0 %v1285
    %1521 = vmatprep.subr.bf16.mxu0 %v1290
    %1522 = vmatpush1.bf16.msra.mxu0 %v1289
    %1523 = vmatprep.subr.bf16.mxu0 %v1294
    %1524 = vmatpush1.bf16.msra.mxu0 %v1293
    %1525 = vmatprep.subr.bf16.mxu0 %v1298
    %1526 = vmatpush1.bf16.msra.mxu0 %v1297
    %1527 = vmatprep.subr.bf16.mxu0 %v1302
    %1528 = vmatpush1.bf16.msra.mxu0 %v1301
    %1529 = vmatprep.mubr.bf16.mxu0 %v704
    %1530 = vmatmul.mubr.bf16.gmra.mrb[0].mxu0 %v703
    %v1531 = vpop.f32.mrb[0].mxu0
    %v1532 = vadd.f32 %v840, %v1531
    %v1533 = vpop.f32.mrb[0].mxu0
    %v1534 = vadd.f32 %v844, %v1533
    %v1535 = vpop.f32.mrb[0].mxu0
    %v1536 = vadd.f32 %v840, %v1535
    %v1537 = vpop.f32.mrb[0].mxu0
    %v1538 = vadd.f32 %v844, %v1537
    %1539 = vdwg.mxu0
    %1540 = vmatprep.subr.bf16.mxu0 %v1306
    %1541 = vmatpush1.bf16.msra.mxu0 %v1305
    %1542 = vmatprep.subr.bf16.mxu0 %v1310
    %1543 = vmatpush1.bf16.msra.mxu0 %v1309
    %1544 = vmatprep.subr.bf16.mxu0 %v1314
    %1545 = vmatpush1.bf16.msra.mxu0 %v1313
    %1546 = vmatprep.subr.bf16.mxu0 %v1318
    %1547 = vmatpush1.bf16.msra.mxu0 %v1317
    %1548 = vmatprep.subr.bf16.mxu0 %v1322
    %1549 = vmatpush1.bf16.msra.mxu0 %v1321
    %1550 = vmatprep.subr.bf16.mxu0 %v1326
    %1551 = vmatpush1.bf16.msra.mxu0 %v1325
    %1552 = vmatprep.subr.bf16.mxu0 %v1330
    %1553 = vmatpush1.bf16.msra.mxu0 %v1329
    %1554 = vmatprep.subr.bf16.mxu0 %v1334
    %1555 = vmatpush1.bf16.msra.mxu0 %v1333
    %1556 = vmatprep.subr.bf16.mxu0 %v1338
    %1557 = vmatpush1.bf16.msra.mxu0 %v1337
    %1558 = vmatprep.subr.bf16.mxu0 %v1342
    %1559 = vmatpush1.bf16.msra.mxu0 %v1341
    %1560 = vmatprep.subr.bf16.mxu0 %v1346
    %1561 = vmatpush1.bf16.msra.mxu0 %v1345
    %1562 = vmatprep.subr.bf16.mxu0 %v1350
    %1563 = vmatpush1.bf16.msra.mxu0 %v1349
    %1564 = vmatprep.subr.bf16.mxu0 %v1354
    %1565 = vmatpush1.bf16.msra.mxu0 %v1353
    %1566 = vmatprep.subr.bf16.mxu0 %v1358
    %1567 = vmatpush1.bf16.msra.mxu0 %v1357
    %1568 = vmatprep.subr.bf16.mxu0 %v1362
    %1569 = vmatpush1.bf16.msra.mxu0 %v1361
    %1570 = vmatprep.subr.bf16.mxu0 %v1366
    %1571 = vmatpush1.bf16.msra.mxu0 %v1365
    %1572 = vmatprep.mubr.bf16.mxu0 %v706
    %1573 = vmatmul.mubr.bf16.gmra.mrb[0].mxu0 %v705
    %v1574 = vpop.f32.mrb[0].mxu0
    %v1575 = vadd.f32 %v1532, %v1574
    %v1576 = vpop.f32.mrb[0].mxu0
    %v1577 = vadd.f32 %v1534, %v1576
    %v1578 = vpop.f32.mrb[0].mxu0
    %v1579 = vadd.f32 %v1536, %v1578
    %v1580 = vpop.f32.mrb[0].mxu0
    %v1581 = vadd.f32 %v1538, %v1580
    %1582 = vdwg.mxu0
    %1583 = vmatprep.subr.bf16.mxu0 %v1244
    %1584 = vmatpush1.bf16.msra.mxu0 %v1243
    %1585 = vmatprep.subr.bf16.mxu0 %v1248
    %1586 = vmatpush1.bf16.msra.mxu0 %v1247
    %1587 = vmatprep.subr.bf16.mxu0 %v1252
    %1588 = vmatpush1.bf16.msra.mxu0 %v1251
    %1589 = vmatprep.subr.bf16.mxu0 %v1256
    %1590 = vmatpush1.bf16.msra.mxu0 %v1255
    %1591 = vmatprep.subr.bf16.mxu0 %v1260
    %1592 = vmatpush1.bf16.msra.mxu0 %v1259
    %1593 = vmatprep.subr.bf16.mxu0 %v1264
    %1594 = vmatpush1.bf16.msra.mxu0 %v1263
    %1595 = vmatprep.subr.bf16.mxu0 %v1268
    %1596 = vmatpush1.bf16.msra.mxu0 %v1267
    %1597 = vmatprep.subr.bf16.mxu0 %v1272
    %1598 = vmatpush1.bf16.msra.mxu0 %v1271
    %1599 = vmatprep.subr.bf16.mxu0 %v1276
    %1600 = vmatpush1.bf16.msra.mxu0 %v1275
    %1601 = vmatprep.subr.bf16.mxu0 %v1280
    %1602 = vmatpush1.bf16.msra.mxu0 %v1279
    %1603 = vmatprep.subr.bf16.mxu0 %v1284
    %1604 = vmatpush1.bf16.msra.mxu0 %v1283
    %1605 = vmatprep.subr.bf16.mxu0 %v1288
    %1606 = vmatpush1.bf16.msra.mxu0 %v1287
    %1607 = vmatprep.subr.bf16.mxu0 %v1292
    %1608 = vmatpush1.bf16.msra.mxu0 %v1291
    %1609 = vmatprep.subr.bf16.mxu0 %v1296
    %1610 = vmatpush1.bf16.msra.mxu0 %v1295
    %1611 = vmatprep.subr.bf16.mxu0 %v1300
    %1612 = vmatpush1.bf16.msra.mxu0 %v1299
    %1613 = vmatprep.subr.bf16.mxu0 %v1304
    %1614 = vmatpush1.bf16.msra.mxu0 %v1303
    %1615 = vmatprep.mubr.bf16.mxu0 %v704
    %1616 = vmatmul.mubr.bf16.gmra.mrb[0].mxu0 %v703
    %v1617 = vpop.f32.mrb[0].mxu0
    %v1618 = vadd.f32 %v848, %v1617
    %v1619 = vpop.f32.mrb[0].mxu0
    %v1620 = vadd.f32 %v852, %v1619
    %v1621 = vpop.f32.mrb[0].mxu0
    %v1622 = vadd.f32 %v848, %v1621
    %v1623 = vpop.f32.mrb[0].mxu0
    %v1624 = vadd.f32 %v852, %v1623
    %1625 = vdwg.mxu0
    %1626 = vmatprep.subr.bf16.mxu0 %v1308
    %1627 = vmatpush1.bf16.msra.mxu0 %v1307
    %1628 = vmatprep.subr.bf16.mxu0 %v1312
    %1629 = vmatpush1.bf16.msra.mxu0 %v1311
    %1630 = vmatprep.subr.bf16.mxu0 %v1316
    %1631 = vmatpush1.bf16.msra.mxu0 %v1315
    %1632 = vmatprep.subr.bf16.mxu0 %v1320
    %1633 = vmatpush1.bf16.msra.mxu0 %v1319
    %1634 = vmatprep.subr.bf16.mxu0 %v1324
    %1635 = vmatpush1.bf16.msra.mxu0 %v1323
    %1636 = vmatprep.subr.bf16.mxu0 %v1328
    %1637 = vmatpush1.bf16.msra.mxu0 %v1327
    %1638 = vmatprep.subr.bf16.mxu0 %v1332
    %1639 = vmatpush1.bf16.msra.mxu0 %v1331
    %1640 = vmatprep.subr.bf16.mxu0 %v1336
    %1641 = vmatpush1.bf16.msra.mxu0 %v1335
    %1642 = vmatprep.subr.bf16.mxu0 %v1340
    %1643 = vmatpush1.bf16.msra.mxu0 %v1339
    %1644 = vmatprep.subr.bf16.mxu0 %v1344
    %1645 = vmatpush1.bf16.msra.mxu0 %v1343
    %1646 = vmatprep.subr.bf16.mxu0 %v1348
    %1647 = vmatpush1.bf16.msra.mxu0 %v1347
    %1648 = vmatprep.subr.bf16.mxu0 %v1352
    %1649 = vmatpush1.bf16.msra.mxu0 %v1351
    %1650 = vmatprep.subr.bf16.mxu0 %v1356
    %1651 = vmatpush1.bf16.msra.mxu0 %v1355
    %1652 = vmatprep.subr.bf16.mxu0 %v1360
    %1653 = vmatpush1.bf16.msra.mxu0 %v1359
    %1654 = vmatprep.subr.bf16.mxu0 %v1364
    %1655 = vmatpush1.bf16.msra.mxu0 %v1363
    %1656 = vmatprep.subr.bf16.mxu0 %v1368
    %1657 = vmatpush1.bf16.msra.mxu0 %v1367
    %1658 = vmatprep.mubr.bf16.mxu0 %v706
    %1659 = vmatmul.mubr.bf16.gmra.mrb[0].mxu0 %v705
    %v1660 = vpop.f32.mrb[0].mxu0
    %v1661 = vadd.f32 %v1618, %v1660
    %v1662 = vpop.f32.mrb[0].mxu0
    %v1663 = vadd.f32 %v1620, %v1662
    %v1664 = vpop.f32.mrb[0].mxu0
    %v1665 = vadd.f32 %v1622, %v1664
    %v1666 = vpop.f32.mrb[0].mxu0
    %v1667 = vadd.f32 %v1624, %v1666
    %1668 = vdwg.mxu0
    %v1669 = vxor.u32 %v1575, 2147483648
    %v1670 = vxor.u32 %v1577, 2147483648
    %v1671 = vxor.u32 %v1661, 2147483648
    %v1672 = vxor.u32 %v1663, 2147483648
    %v1673 = vxor.u32 %v1579, 2147483648
    %v1674 = vxor.u32 %v1581, 2147483648
    %v1675 = vxor.u32 %v1665, 2147483648
    %v1676 = vxor.u32 %v1667, 2147483648
    %v1677 = vmul.f32 %v1669, 1.442695
    %v1678 = vpow.pop %v1677
    %v1679 = vmul.f32 %v1670, 1.442695
    %v1680 = vpow.pop %v1679
    %v1681 = vmul.f32 %v1671, 1.442695
    %v1682 = vpow.pop %v1681
    %v1683 = vmul.f32 %v1672, 1.442695
    %v1684 = vpow.pop %v1683
    %v1685 = vmul.f32 %v1673, 1.442695
    %v1686 = vpow.pop %v1685
    %v1687 = vmul.f32 %v1674, 1.442695
    %v1688 = vpow.pop %v1687
    %v1689 = vmul.f32 %v1675, 1.442695
    %v1690 = vpow.pop %v1689
    %v1691 = vmul.f32 %v1676, 1.442695
    %v1692 = vpow.pop %v1691
    %v1693 = vadd.f32 %v1678, 1.0
    %v1694 = vadd.f32 %v1680, 1.0
    %v1695 = vadd.f32 %v1682, 1.0
    %v1696 = vadd.f32 %v1684, 1.0
    %v1697 = vadd.f32 %v1686, 1.0
    %v1698 = vadd.f32 %v1688, 1.0
    %v1699 = vadd.f32 %v1690, 1.0
    %v1700 = vadd.f32 %v1692, 1.0
    %v1701 = vrcp.pop %v1693
    %v1702 = vmul.f32 1.0, %v1701
    %v1703 = vrcp.pop %v1694
    %v1704 = vmul.f32 1.0, %v1703
    %v1705 = vrcp.pop %v1695
    %v1706 = vmul.f32 1.0, %v1705
    %v1707 = vrcp.pop %v1696
    %v1708 = vmul.f32 1.0, %v1707
    %v1709 = vrcp.pop %v1697
    %v1710 = vmul.f32 1.0, %v1709
    %v1711 = vrcp.pop %v1698
    %v1712 = vmul.f32 1.0, %v1711
    %v1713 = vrcp.pop %v1699
    %v1714 = vmul.f32 1.0, %v1713
    %v1715 = vrcp.pop %v1700
    %v1716 = vmul.f32 1.0, %v1715
    %v1717 = vmul.f32 %v1575, %v1702
    %v1718 = vmul.f32 %v1577, %v1704
    %v1719 = vmul.f32 %v1661, %v1706
    %v1720 = vmul.f32 %v1663, %v1708
    %v1721 = vmul.f32 %v1579, %v1710
    %v1722 = vmul.f32 %v1581, %v1712
    %v1723 = vmul.f32 %v1665, %v1714
    %v1724 = vmul.f32 %v1667, %v1716
    %v1725 = vpack.c.bf16 %v1721, %v1717
    %v1726 = vpack.c.bf16 %v1722, %v1718
    %v1727 = vpack.c.bf16 %v1723, %v1719
    %v1728 = vpack.c.bf16 %v1724, %v1720
    %v1729 = vld [vmem:[%s10] sm:$0xf]
    %v1730 = vld [vmem:[%s10 + $0x4] sm:$0xf]
    %v1731 = vld [vmem:[%s10 + $0x8] sm:$0xf]
    %v1732 = vld [vmem:[%s10 + $0xc] sm:$0xf]
    %v1733 = vld [vmem:[%s10 + $0x10] sm:$0xf]
    %v1734 = vld [vmem:[%s10 + $0x14] sm:$0xf]
    %v1735 = vld [vmem:[%s10 + $0x18] sm:$0xf]
    %v1736 = vld [vmem:[%s10 + $0x1c] sm:$0xf]
    %v1737 = vld [vmem:[%s10 + $0x20] sm:$0xf]
    %v1738 = vld [vmem:[%s10 + $0x24] sm:$0xf]
    %v1739 = vld [vmem:[%s10 + $0x28] sm:$0xf]
    %v1740 = vld [vmem:[%s10 + $0x2c] sm:$0xf]
    %v1741 = vld [vmem:[%s10 + $0x30] sm:$0xf]
    %v1742 = vld [vmem:[%s10 + $0x34] sm:$0xf]
    %v1743 = vld [vmem:[%s10 + $0x38] sm:$0xf]
    %v1744 = vld [vmem:[%s10 + $0x3c] sm:$0xf]
    %v1745 = vld [vmem:[%s10 + $0x40] sm:$0xf]
    %v1746 = vld [vmem:[%s10 + $0x44] sm:$0xf]
    %v1747 = vld [vmem:[%s10 + $0x48] sm:$0xf]
    %v1748 = vld [vmem:[%s10 + $0x4c] sm:$0xf]
    %v1749 = vld [vmem:[%s10 + $0x50] sm:$0xf]
    %v1750 = vld [vmem:[%s10 + $0x54] sm:$0xf]
    %v1751 = vld [vmem:[%s10 + $0x58] sm:$0xf]
    %v1752 = vld [vmem:[%s10 + $0x5c] sm:$0xf]
    %v1753 = vld [vmem:[%s10 + $0x60] sm:$0xf]
    %v1754 = vld [vmem:[%s10 + $0x64] sm:$0xf]
    %v1755 = vld [vmem:[%s10 + $0x68] sm:$0xf]
    %v1756 = vld [vmem:[%s10 + $0x6c] sm:$0xf]
    %v1757 = vld [vmem:[%s10 + $0x70] sm:$0xf]
    %v1758 = vld [vmem:[%s10 + $0x74] sm:$0xf]
    %v1759 = vld [vmem:[%s10 + $0x78] sm:$0xf]
    %v1760 = vld [vmem:[%s10 + $0x7c] sm:$0xf]
    %v1761 = vld [vmem:[%s10 + $0x80] sm:$0xf]
    %v1762 = vld [vmem:[%s10 + $0x84] sm:$0xf]
    %v1763 = vld [vmem:[%s10 + $0x88] sm:$0xf]
    %v1764 = vld [vmem:[%s10 + $0x8c] sm:$0xf]
    %v1765 = vld [vmem:[%s10 + $0x90] sm:$0xf]
    %v1766 = vld [vmem:[%s10 + $0x94] sm:$0xf]
    %v1767 = vld [vmem:[%s10 + $0x98] sm:$0xf]
    %v1768 = vld [vmem:[%s10 + $0x9c] sm:$0xf]
    %v1769 = vld [vmem:[%s10 + $0xa0] sm:$0xf]
    %v1770 = vld [vmem:[%s10 + $0xa4] sm:$0xf]
    %v1771 = vld [vmem:[%s10 + $0xa8] sm:$0xf]
    %v1772 = vld [vmem:[%s10 + $0xac] sm:$0xf]
    %v1773 = vld [vmem:[%s10 + $0xb0] sm:$0xf]
    %v1774 = vld [vmem:[%s10 + $0xb4] sm:$0xf]
    %v1775 = vld [vmem:[%s10 + $0xb8] sm:$0xf]
    %v1776 = vld [vmem:[%s10 + $0xbc] sm:$0xf]
    %v1777 = vld [vmem:[%s10 + $0xc0] sm:$0xf]
    %v1778 = vld [vmem:[%s10 + $0xc4] sm:$0xf]
    %v1779 = vld [vmem:[%s10 + $0xc8] sm:$0xf]
    %v1780 = vld [vmem:[%s10 + $0xcc] sm:$0xf]
    %v1781 = vld [vmem:[%s10 + $0xd0] sm:$0xf]
    %v1782 = vld [vmem:[%s10 + $0xd4] sm:$0xf]
    %v1783 = vld [vmem:[%s10 + $0xd8] sm:$0xf]
    %v1784 = vld [vmem:[%s10 + $0xdc] sm:$0xf]
    %v1785 = vld [vmem:[%s10 + $0xe0] sm:$0xf]
    %v1786 = vld [vmem:[%s10 + $0xe4] sm:$0xf]
    %v1787 = vld [vmem:[%s10 + $0xe8] sm:$0xf]
    %v1788 = vld [vmem:[%s10 + $0xec] sm:$0xf]
    %v1789 = vld [vmem:[%s10 + $0xf0] sm:$0xf]
    %v1790 = vld [vmem:[%s10 + $0xf4] sm:$0xf]
    %v1791 = vld [vmem:[%s10 + $0xf8] sm:$0xf]
    %v1792 = vld [vmem:[%s10 + $0xfc] sm:$0xf]
    %v1793 = vld [vmem:[#allocation10] sm:$0x1]
    %v1795 = vlaneseq
    %v1796 = vshrl.u32 %v1795, 7
    %v1797 = vsub.s32 0, %v1796
    %v1798 = vrot.slane %v1793, %v1797
    %v1864 = vunpack.c.l.b16 %v1729
    %v1865 = vunpack.c.l.b16 %v1730
    %v1866 = vunpack.c.l.b16 %v1731
    %v1867 = vunpack.c.l.b16 %v1732
    %v1868 = vunpack.c.l.b16 %v1733
    %v1869 = vunpack.c.l.b16 %v1734
    %v1870 = vunpack.c.l.b16 %v1735
    %v1871 = vunpack.c.l.b16 %v1736
    %v1872 = vunpack.c.l.b16 %v1737
    %v1873 = vunpack.c.l.b16 %v1738
    %v1874 = vunpack.c.l.b16 %v1739
    %v1875 = vunpack.c.l.b16 %v1740
    %v1876 = vunpack.c.l.b16 %v1741
    %v1877 = vunpack.c.l.b16 %v1742
    %v1878 = vunpack.c.l.b16 %v1743
    %v1879 = vunpack.c.l.b16 %v1744
    %v1880 = vunpack.c.l.b16 %v1745
    %v1881 = vunpack.c.l.b16 %v1746
    %v1882 = vunpack.c.l.b16 %v1747
    %v1883 = vunpack.c.l.b16 %v1748
    %v1884 = vunpack.c.l.b16 %v1749
    %v1885 = vunpack.c.l.b16 %v1750
    %v1886 = vunpack.c.l.b16 %v1751
    %v1887 = vunpack.c.l.b16 %v1752
    %v1888 = vunpack.c.l.b16 %v1753
    %v1889 = vunpack.c.l.b16 %v1754
    %v1890 = vunpack.c.l.b16 %v1755
    %v1891 = vunpack.c.l.b16 %v1756
    %v1892 = vunpack.c.l.b16 %v1757
    %v1893 = vunpack.c.l.b16 %v1758
    %v1894 = vunpack.c.l.b16 %v1759
    %v1895 = vunpack.c.l.b16 %v1760
    %v1896 = vunpack.c.l.b16 %v1761
    %v1897 = vunpack.c.l.b16 %v1762
    %v1898 = vunpack.c.l.b16 %v1763
    %v1899 = vunpack.c.l.b16 %v1764
    %v1900 = vunpack.c.l.b16 %v1765
    %v1901 = vunpack.c.l.b16 %v1766
    %v1902 = vunpack.c.l.b16 %v1767
    %v1903 = vunpack.c.l.b16 %v1768
    %v1904 = vunpack.c.l.b16 %v1769
    %v1905 = vunpack.c.l.b16 %v1770
    %v1906 = vunpack.c.l.b16 %v1771
    %v1907 = vunpack.c.l.b16 %v1772
    %v1908 = vunpack.c.l.b16 %v1773
    %v1909 = vunpack.c.l.b16 %v1774
    %v1910 = vunpack.c.l.b16 %v1775
    %v1911 = vunpack.c.l.b16 %v1776
    %v1912 = vunpack.c.l.b16 %v1777
    %v1913 = vunpack.c.l.b16 %v1778
    %v1914 = vunpack.c.l.b16 %v1779
    %v1915 = vunpack.c.l.b16 %v1780
    %v1916 = vunpack.c.l.b16 %v1781
    %v1917 = vunpack.c.l.b16 %v1782
    %v1918 = vunpack.c.l.b16 %v1783
    %v1919 = vunpack.c.l.b16 %v1784
    %v1920 = vunpack.c.l.b16 %v1785
    %v1921 = vunpack.c.l.b16 %v1786
    %v1922 = vunpack.c.l.b16 %v1787
    %v1923 = vunpack.c.l.b16 %v1788
    %v1924 = vunpack.c.l.b16 %v1789
    %v1925 = vunpack.c.l.b16 %v1790
    %v1926 = vunpack.c.l.b16 %v1791
    %v1927 = vunpack.c.l.b16 %v1792
    %v1928 = vpack.c.b16 %v1865, %v1864
    %v1929 = vpack.c.b16 %v1867, %v1866
    %v1930 = vpack.c.b16 %v1869, %v1868
    %v1931 = vpack.c.b16 %v1871, %v1870
    %v1932 = vpack.c.b16 %v1873, %v1872
    %v1933 = vpack.c.b16 %v1875, %v1874
    %v1934 = vpack.c.b16 %v1877, %v1876
    %v1935 = vpack.c.b16 %v1879, %v1878
    %v1936 = vpack.c.b16 %v1881, %v1880
    %v1937 = vpack.c.b16 %v1883, %v1882
    %v1938 = vpack.c.b16 %v1885, %v1884
    %v1939 = vpack.c.b16 %v1887, %v1886
    %v1940 = vpack.c.b16 %v1889, %v1888
    %v1941 = vpack.c.b16 %v1891, %v1890
    %v1942 = vpack.c.b16 %v1893, %v1892
    %v1943 = vpack.c.b16 %v1895, %v1894
    %v1944 = vpack.c.b16 %v1897, %v1896
    %v1945 = vpack.c.b16 %v1899, %v1898
    %v1946 = vpack.c.b16 %v1901, %v1900
    %v1947 = vpack.c.b16 %v1903, %v1902
    %v1948 = vpack.c.b16 %v1905, %v1904
    %v1949 = vpack.c.b16 %v1907, %v1906
    %v1950 = vpack.c.b16 %v1909, %v1908
    %v1951 = vpack.c.b16 %v1911, %v1910
    %v1952 = vpack.c.b16 %v1913, %v1912
    %v1953 = vpack.c.b16 %v1915, %v1914
    %v1954 = vpack.c.b16 %v1917, %v1916
    %v1955 = vpack.c.b16 %v1919, %v1918
    %v1956 = vpack.c.b16 %v1921, %v1920
    %v1957 = vpack.c.b16 %v1923, %v1922
    %v1958 = vpack.c.b16 %v1925, %v1924
    %v1959 = vpack.c.b16 %v1927, %v1926
    %1992 = vmatprep.subr.bf16.mxu0 0
    %1993 = vmatpush1.bf16.msra.mxu0 %v1928
    %1994 = vmatprep.subr.bf16.mxu0 0
    %1995 = vmatpush1.bf16.msra.mxu0 %v1929
    %1996 = vmatprep.subr.bf16.mxu0 0
    %1997 = vmatpush1.bf16.msra.mxu0 %v1930
    %1998 = vmatprep.subr.bf16.mxu0 0
    %1999 = vmatpush1.bf16.msra.mxu0 %v1931
    %2000 = vmatprep.subr.bf16.mxu0 0
    %2001 = vmatpush1.bf16.msra.mxu0 %v1932
    %2002 = vmatprep.subr.bf16.mxu0 0
    %2003 = vmatpush1.bf16.msra.mxu0 %v1933
    %2004 = vmatprep.subr.bf16.mxu0 0
    %2005 = vmatpush1.bf16.msra.mxu0 %v1934
    %2006 = vmatprep.subr.bf16.mxu0 0
    %2007 = vmatpush1.bf16.msra.mxu0 %v1935
    %2008 = vmatprep.subr.bf16.mxu0 0
    %2009 = vmatpush1.bf16.msra.mxu0 %v1936
    %2010 = vmatprep.subr.bf16.mxu0 0
    %2011 = vmatpush1.bf16.msra.mxu0 %v1937
    %2012 = vmatprep.subr.bf16.mxu0 0
    %2013 = vmatpush1.bf16.msra.mxu0 %v1938
    %2014 = vmatprep.subr.bf16.mxu0 0
    %2015 = vmatpush1.bf16.msra.mxu0 %v1939
    %2016 = vmatprep.subr.bf16.mxu0 0
    %2017 = vmatpush1.bf16.msra.mxu0 %v1940
    %2018 = vmatprep.subr.bf16.mxu0 0
    %2019 = vmatpush1.bf16.msra.mxu0 %v1941
    %2020 = vmatprep.subr.bf16.mxu0 0
    %2021 = vmatpush1.bf16.msra.mxu0 %v1942
    %2022 = vmatprep.subr.bf16.mxu0 0
    %2023 = vmatpush1.bf16.msra.mxu0 %v1943
    %2024 = vmatprep.mubr.bf16.mxu0 %v1726
    %2025 = vmatmul.mubr.bf16.gmra.mrb[0].mxu0 %v1725
    %v2026 = vpop.f32.mrb[0].mxu0
    %v2027 = vadd.f32 %v1798, %v2026
    %v2028 = vpop.f32.mrb[0].mxu0
    %v2029 = vpop.f32.mrb[0].mxu0
    %v2030 = vadd.f32 %v1798, %v2029
    %v2031 = vpop.f32.mrb[0].mxu0
    %2032 = vdwg.mxu0
    %2033 = vmatprep.subr.bf16.mxu0 0
    %2034 = vmatpush1.bf16.msra.mxu0 %v1944
    %2035 = vmatprep.subr.bf16.mxu0 0
    %2036 = vmatpush1.bf16.msra.mxu0 %v1945
    %2037 = vmatprep.subr.bf16.mxu0 0
    %2038 = vmatpush1.bf16.msra.mxu0 %v1946
    %2039 = vmatprep.subr.bf16.mxu0 0
    %2040 = vmatpush1.bf16.msra.mxu0 %v1947
    %2041 = vmatprep.subr.bf16.mxu0 0
    %2042 = vmatpush1.bf16.msra.mxu0 %v1948
    %2043 = vmatprep.subr.bf16.mxu0 0
    %2044 = vmatpush1.bf16.msra.mxu0 %v1949
    %2045 = vmatprep.subr.bf16.mxu0 0
    %2046 = vmatpush1.bf16.msra.mxu0 %v1950
    %2047 = vmatprep.subr.bf16.mxu0 0
    %2048 = vmatpush1.bf16.msra.mxu0 %v1951
    %2049 = vmatprep.subr.bf16.mxu0 0
    %2050 = vmatpush1.bf16.msra.mxu0 %v1952
    %2051 = vmatprep.subr.bf16.mxu0 0
    %2052 = vmatpush1.bf16.msra.mxu0 %v1953
    %2053 = vmatprep.subr.bf16.mxu0 0
    %2054 = vmatpush1.bf16.msra.mxu0 %v1954
    %2055 = vmatprep.subr.bf16.mxu0 0
    %2056 = vmatpush1.bf16.msra.mxu0 %v1955
    %2057 = vmatprep.subr.bf16.mxu0 0
    %2058 = vmatpush1.bf16.msra.mxu0 %v1956
    %2059 = vmatprep.subr.bf16.mxu0 0
    %2060 = vmatpush1.bf16.msra.mxu0 %v1957
    %2061 = vmatprep.subr.bf16.mxu0 0
    %2062 = vmatpush1.bf16.msra.mxu0 %v1958
    %2063 = vmatprep.subr.bf16.mxu0 0
    %2064 = vmatpush1.bf16.msra.mxu0 %v1959
    %2065 = vmatprep.mubr.bf16.mxu0 %v1728
    %2066 = vmatmul.mubr.bf16.gmra.mrb[0].mxu0 %v1727
    %v2067 = vpop.f32.mrb[0].mxu0
    %v2068 = vadd.f32 %v2027, %v2067
    %v2069 = vpop.f32.mrb[0].mxu0
    %v2070 = vpop.f32.mrb[0].mxu0
    %v2071 = vadd.f32 %v2030, %v2070
    %v2072 = vpop.f32.mrb[0].mxu0
    %2073 = vdwg.mxu0
    %2074 = vst [vmem:[#allocation11] sm:$0xff] %v2068
    %2075 = vst [vmem:[#allocation11 + $0x8] sm:$0xff] %v2071
    // Predicated region
    $region70: #{_forward_impl.1} parent=1 // pred_check
      _
    $region71: #{_forward_impl.1} parent=1 // pred_check_branch
      %2077 = sbr.rel (0) target = $region73
    $region72: #{_forward_impl.1} parent=1 // pred_region
      %s2079 = ssub.s32 256, 256
      %2080 = vsyncadd [#allocation4], %s2079
      %s2081 = sshll.u32 [#allocation11], 4
      %s2082 = int_to_ptr.vmem [resolvable:$true] %s2081
      %2087 = dma.vmem_to_hbm [thread:$0]  %s2082, 256, %s12, [#allocation4], 128, 128, 8
    $region73: #{_forward_impl.1} parent=1 // pred_fallthru
      _
    // Predicated region
    $region74: #{_forward_impl.1} parent=1 // pred_check
      _
    $region75: #{_forward_impl.1} parent=1 // pred_check_branch
      %2089 = sbr.rel (0) target = $region77
    $region76: #{_forward_impl.1} parent=1 // pred_region
      %2090 = dma.done [#allocation4], 256
    $region77: #{_forward_impl.1} parent=1 // pred_fallthru
      _
    %2091 = vsyncpa [#allocation3], 1
    %2092 = vsyncpa [#allocation6], 1
    %2093 = vsyncpa [#allocation9], 1
    %2094 = vsyncpa [#allocation4], 1

</llo_original>
